<compile_context>
chip_gen: v6e
topology: v6e:2x2x1
jax: 0.10.0
libtpu: 0.0.40
codegen_flags: <defaults>
</compile_context>

<pallas_src>
import functools

import jax
import jax.numpy as jnp
from jax.experimental import pallas as pl
from jax.experimental.pallas import tpu as pltpu

LANE = 128
GRAN = 1024  # batch-tile granularity: 8 sublanes x 128 lanes, keeps blocks dense


def _round_up(n, m):
    return ((n + m - 1) // m) * m


def _choose_tile(batch, tile_b):
    """Rows per grid step: multiple of 1024 (dense (8,128) vregs); keep >=2 grid
    steps when possible so ("parallel",) can use both v7x TensorCores."""
    b_pad = _round_up(batch, GRAN)
    tile = min(_round_up(max(tile_b, GRAN), GRAN), b_pad)
    if b_pad >= 2 * GRAN:
        tile = min(tile, max(GRAN, (b_pad // 2) // GRAN * GRAN))
    return tile


def mlp_kernel(*refs):
    """refs = (x_ref, w1, b1, w2, b2, ..., wL, bL, out_ref).

    x_ref  : (in_dim, TB, 128) VMEM f32   -- batch-in-lanes input slab
    wl     : (K, N)            SMEM f32   -- un-padded weights, read as scalars
    bl     : (N,)              SMEM f32
    out_ref: (out_dim, TB, 128) VMEM f32  -- lane-dense output slab
    """
    x_ref, o_ref = refs[0], refs[-1]
    wb = refs[1:-1]
    n_layers = len(wb) // 2

    # Activations: list of per-feature (TB, 128) slabs -> every elementwise op
    # uses fully dense vregs (8 sublanes x 128 lanes of batch elements).
    h = [x_ref[k] for k in range(x_ref.shape[0])]

    for layer in range(n_layers):
        w_ref, b_ref = wb[2 * layer], wb[2 * layer + 1]
        k_dim, n_dim = w_ref.shape
        new_h = []
        for n in range(n_dim):
            acc = h[0] * w_ref[0, n]          # SMEM scalar -> VPU broadcast MAC
            for k in range(1, k_dim):
                acc = acc + h[k] * w_ref[k, n]
            acc = acc + b_ref[n]
            if layer < n_layers - 1:
                acc = jnp.maximum(acc, 0.0)    # ReLU (no ReLU after last layer)
            new_h.append(acc)
        h = new_h

    for n in range(o_ref.shape[0]):
        o_ref[n] = h[n]


@functools.partial(jax.jit, static_argnames=("tile_b",))
def mlp_forward(x, params, *, tile_b=16384):
    """x: (B, 2) float; params: [(W, b), ...] with W: (in, out). Returns (B, 3) f32."""
    B, in_dim = x.shape
    out_dim = params[-1][0].shape[1]

    tile = _choose_tile(B, tile_b)
    Bp = _round_up(B, tile)
    TB = tile // LANE

    # Lane-dense, batch-in-lanes input: (in_dim, Bp//128, 128).
    xt = jnp.pad(x.astype(jnp.float32).T, ((0, 0), (0, Bp - B)))
    xt = xt.reshape(in_dim, Bp // LANE, LANE)

    flat = []
    for (w, b) in params:
        flat.append(w.astype(jnp.float32))
        flat.append(b.astype(jnp.float32))

    in_specs = [pl.BlockSpec((in_dim, TB, LANE), lambda i: (0, i, 0))]
    # Un-padded weights/biases: whole-array residents in SMEM (scalar reads),
    # no pipeline buffers.
    in_specs += [pl.BlockSpec(memory_space=pltpu.MemorySpace.SMEM)] * len(flat)

    cost = pl.CostEstimate(
        flops=2 * B * sum(w.shape[0] * w.shape[1] for (w, _) in params),
        transcendentals=0,
        bytes_accessed=B * (in_dim + out_dim) * 4
        + sum(w.shape[0] * w.shape[1] * 4 + b.shape[0] * 4 for (w, b) in params),
    )

    out = pl.pallas_call(
        mlp_kernel,
        out_shape=jax.ShapeDtypeStruct((out_dim, Bp // LANE, LANE), jnp.float32),
        grid=(Bp // tile,),
        in_specs=in_specs,
        out_specs=pl.BlockSpec((out_dim, TB, LANE), lambda i: (0, i, 0)),
        compiler_params=pltpu.CompilerParams(
            dimension_semantics=("parallel",)),
        cost_estimate=cost,
    )(xt, *flat)

    # (out_dim, Bp//128, 128) -> (B, out_dim): wrapper-side layout plumbing only.
    return out.reshape(out_dim, Bp)[:, :B].T


def init_params(key, hidden_layer_sizes=None):
    if hidden_layer_sizes is None:
        hidden_layer_sizes = [8, 8, 8]
    sizes = [2] + list(hidden_layer_sizes) + [3]
    params = []
    for i in range(len(sizes) - 1):
        fan_in, fan_out = sizes[i], sizes[i + 1]
        key, kw, kb = jax.random.split(key, 3)
        bound = 1.0 / (fan_in ** 0.5)
        w = jax.random.uniform(kw, (fan_in, fan_out), jnp.float32,
                               minval=-bound, maxval=bound)
        b = jax.random.uniform(kb, (fan_out,), jnp.float32,
                               minval=-bound, maxval=bound)
        params.append((w, b))
    return params


def mlp_reference(x, params):
    h = x
    for i, (w, b) in enumerate(params):
        h = h @ w + b
        if i < len(params) - 1:
            h = jnp.maximum(h, 0.0)
    return h


if __name__ == "__main__":
    key = jax.random.PRNGKey(0)
    kx, kp = jax.random.split(key)

    params = init_params(kp)

    # Small-batch check (single grid step).
    batch = 8
    x = jax.random.normal(kx, (batch, 2), jnp.float32)
    ref = mlp_reference(x, params)
    out = jax.block_until_ready(mlp_forward(x, params))
    assert out.shape == (batch, 3), out.shape
    assert jnp.allclose(out, ref, atol=1e-5, rtol=1e-5), "small-batch mismatch"

    # Multi-step tiled grid (batch not a multiple of the tile) -> exercises the
    # ("parallel",) grid and the batch padding/trim path.
    big_batch = 2500
    xb = jax.random.normal(kx, (big_batch, 2), jnp.float32)
    out_b = jax.block_until_ready(mlp_forward(xb, params, tile_b=1024))
    ref_b = mlp_reference(xb, params)
    assert out_b.shape == (big_batch, 3), out_b.shape
    assert jnp.allclose(out_b, ref_b, atol=1e-5, rtol=1e-5), "tiled mismatch"

    print("KERNEL_OK")
</pallas_src>

<mosaic_0001>
module attributes {stable_mosaic.version = 11 : i64} {
  func.func @mlp_kernel(%arg0: i32, %arg1: memref<2x8x128xf32, #tpu.memory_space<vmem>>, %arg2: memref<2x8xf32, #tpu.memory_space<smem>>, %arg3: memref<8xf32, #tpu.memory_space<smem>>, %arg4: memref<8x8xf32, #tpu.memory_space<smem>>, %arg5: memref<8xf32, #tpu.memory_space<smem>>, %arg6: memref<8x8xf32, #tpu.memory_space<smem>>, %arg7: memref<8xf32, #tpu.memory_space<smem>>, %arg8: memref<8x3xf32, #tpu.memory_space<smem>>, %arg9: memref<3xf32, #tpu.memory_space<smem>>, %arg10: memref<3x8x128xf32, #tpu.memory_space<vmem>>) attributes {dimension_semantics = [#tpu.dimension_semantics<parallel>], iteration_bounds = array<i64: 1>, scalar_prefetch = 0 : i64, scratch_operands = 0 : i64, tpu.core_type = #tpu.core_type<tc>, window_params = [{transform_indices = @transform_0, window_bounds = array<i64: 2, 8, 128>}, {transform_indices = @transform_1, window_bounds = array<i64: 2, 8>}, {transform_indices = @transform_2, window_bounds = array<i64: 8>}, {transform_indices = @transform_3, window_bounds = array<i64: 8, 8>}, {transform_indices = @transform_4, window_bounds = array<i64: 8>}, {transform_indices = @transform_5, window_bounds = array<i64: 8, 8>}, {transform_indices = @transform_6, window_bounds = array<i64: 8>}, {transform_indices = @transform_7, window_bounds = array<i64: 8, 3>}, {transform_indices = @transform_8, window_bounds = array<i64: 3>}, {transform_indices = @transform_9, window_bounds = array<i64: 3, 8, 128>}]} {
    %c0 = arith.constant 0 : index
    %c0_0 = arith.constant 0 : index
    %c0_1 = arith.constant 0 : index
    %0 = vector.load %arg1[%c0, %c0_0, %c0_1] : memref<2x8x128xf32, #tpu.memory_space<vmem>>, vector<1x8x128xf32>
    %1 = vector.shape_cast %0 : vector<1x8x128xf32> to vector<8x128xf32>
    %c1 = arith.constant 1 : index
    %c0_2 = arith.constant 0 : index
    %c0_3 = arith.constant 0 : index
    %2 = vector.load %arg1[%c1, %c0_2, %c0_3] : memref<2x8x128xf32, #tpu.memory_space<vmem>>, vector<1x8x128xf32>
    %3 = vector.shape_cast %2 : vector<1x8x128xf32> to vector<8x128xf32>
    %c0_4 = arith.constant 0 : index
    %c0_5 = arith.constant 0 : index
    %4 = memref.load %arg2[%c0_4, %c0_5] : memref<2x8xf32, #tpu.memory_space<smem>>
    %5 = vector.broadcast %4 : f32 to vector<8x128xf32>
    %6 = arith.mulf %1, %5 : vector<8x128xf32>
    %c1_6 = arith.constant 1 : index
    %c0_7 = arith.constant 0 : index
    %7 = memref.load %arg2[%c1_6, %c0_7] : memref<2x8xf32, #tpu.memory_space<smem>>
    %8 = vector.broadcast %7 : f32 to vector<8x128xf32>
    %9 = arith.mulf %3, %8 : vector<8x128xf32>
    %10 = arith.addf %6, %9 : vector<8x128xf32>
    %c0_8 = arith.constant 0 : index
    %11 = memref.load %arg3[%c0_8] : memref<8xf32, #tpu.memory_space<smem>>
    %12 = vector.broadcast %11 : f32 to vector<8x128xf32>
    %13 = arith.addf %10, %12 : vector<8x128xf32>
    %cst = arith.constant 0.000000e+00 : f32
    %14 = vector.broadcast %cst : f32 to vector<8x128xf32>
    %15 = arith.maximumf %13, %14 : vector<8x128xf32>
    %c0_9 = arith.constant 0 : index
    %c1_10 = arith.constant 1 : index
    %16 = memref.load %arg2[%c0_9, %c1_10] : memref<2x8xf32, #tpu.memory_space<smem>>
    %17 = vector.broadcast %16 : f32 to vector<8x128xf32>
    %18 = arith.mulf %1, %17 : vector<8x128xf32>
    %c1_11 = arith.constant 1 : index
    %c1_12 = arith.constant 1 : index
    %19 = memref.load %arg2[%c1_11, %c1_12] : memref<2x8xf32, #tpu.memory_space<smem>>
    %20 = vector.broadcast %19 : f32 to vector<8x128xf32>
    %21 = arith.mulf %3, %20 : vector<8x128xf32>
    %22 = arith.addf %18, %21 : vector<8x128xf32>
    %c1_13 = arith.constant 1 : index
    %23 = memref.load %arg3[%c1_13] : memref<8xf32, #tpu.memory_space<smem>>
    %24 = vector.broadcast %23 : f32 to vector<8x128xf32>
    %25 = arith.addf %22, %24 : vector<8x128xf32>
    %cst_14 = arith.constant 0.000000e+00 : f32
    %26 = vector.broadcast %cst_14 : f32 to vector<8x128xf32>
    %27 = arith.maximumf %25, %26 : vector<8x128xf32>
    %c0_15 = arith.constant 0 : index
    %c2 = arith.constant 2 : index
    %28 = memref.load %arg2[%c0_15, %c2] : memref<2x8xf32, #tpu.memory_space<smem>>
    %29 = vector.broadcast %28 : f32 to vector<8x128xf32>
    %30 = arith.mulf %1, %29 : vector<8x128xf32>
    %c1_16 = arith.constant 1 : index
    %c2_17 = arith.constant 2 : index
    %31 = memref.load %arg2[%c1_16, %c2_17] : memref<2x8xf32, #tpu.memory_space<smem>>
    %32 = vector.broadcast %31 : f32 to vector<8x128xf32>
    %33 = arith.mulf %3, %32 : vector<8x128xf32>
    %34 = arith.addf %30, %33 : vector<8x128xf32>
    %c2_18 = arith.constant 2 : index
    %35 = memref.load %arg3[%c2_18] : memref<8xf32, #tpu.memory_space<smem>>
    %36 = vector.broadcast %35 : f32 to vector<8x128xf32>
    %37 = arith.addf %34, %36 : vector<8x128xf32>
    %cst_19 = arith.constant 0.000000e+00 : f32
    %38 = vector.broadcast %cst_19 : f32 to vector<8x128xf32>
    %39 = arith.maximumf %37, %38 : vector<8x128xf32>
    %c0_20 = arith.constant 0 : index
    %c3 = arith.constant 3 : index
    %40 = memref.load %arg2[%c0_20, %c3] : memref<2x8xf32, #tpu.memory_space<smem>>
    %41 = vector.broadcast %40 : f32 to vector<8x128xf32>
    %42 = arith.mulf %1, %41 : vector<8x128xf32>
    %c1_21 = arith.constant 1 : index
    %c3_22 = arith.constant 3 : index
    %43 = memref.load %arg2[%c1_21, %c3_22] : memref<2x8xf32, #tpu.memory_space<smem>>
    %44 = vector.broadcast %43 : f32 to vector<8x128xf32>
    %45 = arith.mulf %3, %44 : vector<8x128xf32>
    %46 = arith.addf %42, %45 : vector<8x128xf32>
    %c3_23 = arith.constant 3 : index
    %47 = memref.load %arg3[%c3_23] : memref<8xf32, #tpu.memory_space<smem>>
    %48 = vector.broadcast %47 : f32 to vector<8x128xf32>
    %49 = arith.addf %46, %48 : vector<8x128xf32>
    %cst_24 = arith.constant 0.000000e+00 : f32
    %50 = vector.broadcast %cst_24 : f32 to vector<8x128xf32>
    %51 = arith.maximumf %49, %50 : vector<8x128xf32>
    %c0_25 = arith.constant 0 : index
    %c4 = arith.constant 4 : index
    %52 = memref.load %arg2[%c0_25, %c4] : memref<2x8xf32, #tpu.memory_space<smem>>
    %53 = vector.broadcast %52 : f32 to vector<8x128xf32>
    %54 = arith.mulf %1, %53 : vector<8x128xf32>
    %c1_26 = arith.constant 1 : index
    %c4_27 = arith.constant 4 : index
    %55 = memref.load %arg2[%c1_26, %c4_27] : memref<2x8xf32, #tpu.memory_space<smem>>
    %56 = vector.broadcast %55 : f32 to vector<8x128xf32>
    %57 = arith.mulf %3, %56 : vector<8x128xf32>
    %58 = arith.addf %54, %57 : vector<8x128xf32>
    %c4_28 = arith.constant 4 : index
    %59 = memref.load %arg3[%c4_28] : memref<8xf32, #tpu.memory_space<smem>>
    %60 = vector.broadcast %59 : f32 to vector<8x128xf32>
    %61 = arith.addf %58, %60 : vector<8x128xf32>
    %cst_29 = arith.constant 0.000000e+00 : f32
    %62 = vector.broadcast %cst_29 : f32 to vector<8x128xf32>
    %63 = arith.maximumf %61, %62 : vector<8x128xf32>
    %c0_30 = arith.constant 0 : index
    %c5 = arith.constant 5 : index
    %64 = memref.load %arg2[%c0_30, %c5] : memref<2x8xf32, #tpu.memory_space<smem>>
    %65 = vector.broadcast %64 : f32 to vector<8x128xf32>
    %66 = arith.mulf %1, %65 : vector<8x128xf32>
    %c1_31 = arith.constant 1 : index
    %c5_32 = arith.constant 5 : index
    %67 = memref.load %arg2[%c1_31, %c5_32] : memref<2x8xf32, #tpu.memory_space<smem>>
    %68 = vector.broadcast %67 : f32 to vector<8x128xf32>
    %69 = arith.mulf %3, %68 : vector<8x128xf32>
    %70 = arith.addf %66, %69 : vector<8x128xf32>
    %c5_33 = arith.constant 5 : index
    %71 = memref.load %arg3[%c5_33] : memref<8xf32, #tpu.memory_space<smem>>
    %72 = vector.broadcast %71 : f32 to vector<8x128xf32>
    %73 = arith.addf %70, %72 : vector<8x128xf32>
    %cst_34 = arith.constant 0.000000e+00 : f32
    %74 = vector.broadcast %cst_34 : f32 to vector<8x128xf32>
    %75 = arith.maximumf %73, %74 : vector<8x128xf32>
    %c0_35 = arith.constant 0 : index
    %c6 = arith.constant 6 : index
    %76 = memref.load %arg2[%c0_35, %c6] : memref<2x8xf32, #tpu.memory_space<smem>>
    %77 = vector.broadcast %76 : f32 to vector<8x128xf32>
    %78 = arith.mulf %1, %77 : vector<8x128xf32>
    %c1_36 = arith.constant 1 : index
    %c6_37 = arith.constant 6 : index
    %79 = memref.load %arg2[%c1_36, %c6_37] : memref<2x8xf32, #tpu.memory_space<smem>>
    %80 = vector.broadcast %79 : f32 to vector<8x128xf32>
    %81 = arith.mulf %3, %80 : vector<8x128xf32>
    %82 = arith.addf %78, %81 : vector<8x128xf32>
    %c6_38 = arith.constant 6 : index
    %83 = memref.load %arg3[%c6_38] : memref<8xf32, #tpu.memory_space<smem>>
    %84 = vector.broadcast %83 : f32 to vector<8x128xf32>
    %85 = arith.addf %82, %84 : vector<8x128xf32>
    %cst_39 = arith.constant 0.000000e+00 : f32
    %86 = vector.broadcast %cst_39 : f32 to vector<8x128xf32>
    %87 = arith.maximumf %85, %86 : vector<8x128xf32>
    %c0_40 = arith.constant 0 : index
    %c7 = arith.constant 7 : index
    %88 = memref.load %arg2[%c0_40, %c7] : memref<2x8xf32, #tpu.memory_space<smem>>
    %89 = vector.broadcast %88 : f32 to vector<8x128xf32>
    %90 = arith.mulf %1, %89 : vector<8x128xf32>
    %c1_41 = arith.constant 1 : index
    %c7_42 = arith.constant 7 : index
    %91 = memref.load %arg2[%c1_41, %c7_42] : memref<2x8xf32, #tpu.memory_space<smem>>
    %92 = vector.broadcast %91 : f32 to vector<8x128xf32>
    %93 = arith.mulf %3, %92 : vector<8x128xf32>
    %94 = arith.addf %90, %93 : vector<8x128xf32>
    %c7_43 = arith.constant 7 : index
    %95 = memref.load %arg3[%c7_43] : memref<8xf32, #tpu.memory_space<smem>>
    %96 = vector.broadcast %95 : f32 to vector<8x128xf32>
    %97 = arith.addf %94, %96 : vector<8x128xf32>
    %cst_44 = arith.constant 0.000000e+00 : f32
    %98 = vector.broadcast %cst_44 : f32 to vector<8x128xf32>
    %99 = arith.maximumf %97, %98 : vector<8x128xf32>
    %c0_45 = arith.constant 0 : index
    %c0_46 = arith.constant 0 : index
    %100 = memref.load %arg4[%c0_45, %c0_46] : memref<8x8xf32, #tpu.memory_space<smem>>
    %101 = vector.broadcast %100 : f32 to vector<8x128xf32>
    %102 = arith.mulf %15, %101 : vector<8x128xf32>
    %c1_47 = arith.constant 1 : index
    %c0_48 = arith.constant 0 : index
    %103 = memref.load %arg4[%c1_47, %c0_48] : memref<8x8xf32, #tpu.memory_space<smem>>
    %104 = vector.broadcast %103 : f32 to vector<8x128xf32>
    %105 = arith.mulf %27, %104 : vector<8x128xf32>
    %106 = arith.addf %102, %105 : vector<8x128xf32>
    %c2_49 = arith.constant 2 : index
    %c0_50 = arith.constant 0 : index
    %107 = memref.load %arg4[%c2_49, %c0_50] : memref<8x8xf32, #tpu.memory_space<smem>>
    %108 = vector.broadcast %107 : f32 to vector<8x128xf32>
    %109 = arith.mulf %39, %108 : vector<8x128xf32>
    %110 = arith.addf %106, %109 : vector<8x128xf32>
    %c3_51 = arith.constant 3 : index
    %c0_52 = arith.constant 0 : index
    %111 = memref.load %arg4[%c3_51, %c0_52] : memref<8x8xf32, #tpu.memory_space<smem>>
    %112 = vector.broadcast %111 : f32 to vector<8x128xf32>
    %113 = arith.mulf %51, %112 : vector<8x128xf32>
    %114 = arith.addf %110, %113 : vector<8x128xf32>
    %c4_53 = arith.constant 4 : index
    %c0_54 = arith.constant 0 : index
    %115 = memref.load %arg4[%c4_53, %c0_54] : memref<8x8xf32, #tpu.memory_space<smem>>
    %116 = vector.broadcast %115 : f32 to vector<8x128xf32>
    %117 = arith.mulf %63, %116 : vector<8x128xf32>
    %118 = arith.addf %114, %117 : vector<8x128xf32>
    %c5_55 = arith.constant 5 : index
    %c0_56 = arith.constant 0 : index
    %119 = memref.load %arg4[%c5_55, %c0_56] : memref<8x8xf32, #tpu.memory_space<smem>>
    %120 = vector.broadcast %119 : f32 to vector<8x128xf32>
    %121 = arith.mulf %75, %120 : vector<8x128xf32>
    %122 = arith.addf %118, %121 : vector<8x128xf32>
    %c6_57 = arith.constant 6 : index
    %c0_58 = arith.constant 0 : index
    %123 = memref.load %arg4[%c6_57, %c0_58] : memref<8x8xf32, #tpu.memory_space<smem>>
    %124 = vector.broadcast %123 : f32 to vector<8x128xf32>
    %125 = arith.mulf %87, %124 : vector<8x128xf32>
    %126 = arith.addf %122, %125 : vector<8x128xf32>
    %c7_59 = arith.constant 7 : index
    %c0_60 = arith.constant 0 : index
    %127 = memref.load %arg4[%c7_59, %c0_60] : memref<8x8xf32, #tpu.memory_space<smem>>
    %128 = vector.broadcast %127 : f32 to vector<8x128xf32>
    %129 = arith.mulf %99, %128 : vector<8x128xf32>
    %130 = arith.addf %126, %129 : vector<8x128xf32>
    %c0_61 = arith.constant 0 : index
    %131 = memref.load %arg5[%c0_61] : memref<8xf32, #tpu.memory_space<smem>>
    %132 = vector.broadcast %131 : f32 to vector<8x128xf32>
    %133 = arith.addf %130, %132 : vector<8x128xf32>
    %cst_62 = arith.constant 0.000000e+00 : f32
    %134 = vector.broadcast %cst_62 : f32 to vector<8x128xf32>
    %135 = arith.maximumf %133, %134 : vector<8x128xf32>
    %c0_63 = arith.constant 0 : index
    %c1_64 = arith.constant 1 : index
    %136 = memref.load %arg4[%c0_63, %c1_64] : memref<8x8xf32, #tpu.memory_space<smem>>
    %137 = vector.broadcast %136 : f32 to vector<8x128xf32>
    %138 = arith.mulf %15, %137 : vector<8x128xf32>
    %c1_65 = arith.constant 1 : index
    %c1_66 = arith.constant 1 : index
    %139 = memref.load %arg4[%c1_65, %c1_66] : memref<8x8xf32, #tpu.memory_space<smem>>
    %140 = vector.broadcast %139 : f32 to vector<8x128xf32>
    %141 = arith.mulf %27, %140 : vector<8x128xf32>
    %142 = arith.addf %138, %141 : vector<8x128xf32>
    %c2_67 = arith.constant 2 : index
    %c1_68 = arith.constant 1 : index
    %143 = memref.load %arg4[%c2_67, %c1_68] : memref<8x8xf32, #tpu.memory_space<smem>>
    %144 = vector.broadcast %143 : f32 to vector<8x128xf32>
    %145 = arith.mulf %39, %144 : vector<8x128xf32>
    %146 = arith.addf %142, %145 : vector<8x128xf32>
    %c3_69 = arith.constant 3 : index
    %c1_70 = arith.constant 1 : index
    %147 = memref.load %arg4[%c3_69, %c1_70] : memref<8x8xf32, #tpu.memory_space<smem>>
    %148 = vector.broadcast %147 : f32 to vector<8x128xf32>
    %149 = arith.mulf %51, %148 : vector<8x128xf32>
    %150 = arith.addf %146, %149 : vector<8x128xf32>
    %c4_71 = arith.constant 4 : index
    %c1_72 = arith.constant 1 : index
    %151 = memref.load %arg4[%c4_71, %c1_72] : memref<8x8xf32, #tpu.memory_space<smem>>
    %152 = vector.broadcast %151 : f32 to vector<8x128xf32>
    %153 = arith.mulf %63, %152 : vector<8x128xf32>
    %154 = arith.addf %150, %153 : vector<8x128xf32>
    %c5_73 = arith.constant 5 : index
    %c1_74 = arith.constant 1 : index
    %155 = memref.load %arg4[%c5_73, %c1_74] : memref<8x8xf32, #tpu.memory_space<smem>>
    %156 = vector.broadcast %155 : f32 to vector<8x128xf32>
    %157 = arith.mulf %75, %156 : vector<8x128xf32>
    %158 = arith.addf %154, %157 : vector<8x128xf32>
    %c6_75 = arith.constant 6 : index
    %c1_76 = arith.constant 1 : index
    %159 = memref.load %arg4[%c6_75, %c1_76] : memref<8x8xf32, #tpu.memory_space<smem>>
    %160 = vector.broadcast %159 : f32 to vector<8x128xf32>
    %161 = arith.mulf %87, %160 : vector<8x128xf32>
    %162 = arith.addf %158, %161 : vector<8x128xf32>
    %c7_77 = arith.constant 7 : index
    %c1_78 = arith.constant 1 : index
    %163 = memref.load %arg4[%c7_77, %c1_78] : memref<8x8xf32, #tpu.memory_space<smem>>
    %164 = vector.broadcast %163 : f32 to vector<8x128xf32>
    %165 = arith.mulf %99, %164 : vector<8x128xf32>
    %166 = arith.addf %162, %165 : vector<8x128xf32>
    %c1_79 = arith.constant 1 : index
    %167 = memref.load %arg5[%c1_79] : memref<8xf32, #tpu.memory_space<smem>>
    %168 = vector.broadcast %167 : f32 to vector<8x128xf32>
    %169 = arith.addf %166, %168 : vector<8x128xf32>
    %cst_80 = arith.constant 0.000000e+00 : f32
    %170 = vector.broadcast %cst_80 : f32 to vector<8x128xf32>
    %171 = arith.maximumf %169, %170 : vector<8x128xf32>
    %c0_81 = arith.constant 0 : index
    %c2_82 = arith.constant 2 : index
    %172 = memref.load %arg4[%c0_81, %c2_82] : memref<8x8xf32, #tpu.memory_space<smem>>
    %173 = vector.broadcast %172 : f32 to vector<8x128xf32>
    %174 = arith.mulf %15, %173 : vector<8x128xf32>
    %c1_83 = arith.constant 1 : index
    %c2_84 = arith.constant 2 : index
    %175 = memref.load %arg4[%c1_83, %c2_84] : memref<8x8xf32, #tpu.memory_space<smem>>
    %176 = vector.broadcast %175 : f32 to vector<8x128xf32>
    %177 = arith.mulf %27, %176 : vector<8x128xf32>
    %178 = arith.addf %174, %177 : vector<8x128xf32>
    %c2_85 = arith.constant 2 : index
    %c2_86 = arith.constant 2 : index
    %179 = memref.load %arg4[%c2_85, %c2_86] : memref<8x8xf32, #tpu.memory_space<smem>>
    %180 = vector.broadcast %179 : f32 to vector<8x128xf32>
    %181 = arith.mulf %39, %180 : vector<8x128xf32>
    %182 = arith.addf %178, %181 : vector<8x128xf32>
    %c3_87 = arith.constant 3 : index
    %c2_88 = arith.constant 2 : index
    %183 = memref.load %arg4[%c3_87, %c2_88] : memref<8x8xf32, #tpu.memory_space<smem>>
    %184 = vector.broadcast %183 : f32 to vector<8x128xf32>
    %185 = arith.mulf %51, %184 : vector<8x128xf32>
    %186 = arith.addf %182, %185 : vector<8x128xf32>
    %c4_89 = arith.constant 4 : index
    %c2_90 = arith.constant 2 : index
    %187 = memref.load %arg4[%c4_89, %c2_90] : memref<8x8xf32, #tpu.memory_space<smem>>
    %188 = vector.broadcast %187 : f32 to vector<8x128xf32>
    %189 = arith.mulf %63, %188 : vector<8x128xf32>
    %190 = arith.addf %186, %189 : vector<8x128xf32>
    %c5_91 = arith.constant 5 : index
    %c2_92 = arith.constant 2 : index
    %191 = memref.load %arg4[%c5_91, %c2_92] : memref<8x8xf32, #tpu.memory_space<smem>>
    %192 = vector.broadcast %191 : f32 to vector<8x128xf32>
    %193 = arith.mulf %75, %192 : vector<8x128xf32>
    %194 = arith.addf %190, %193 : vector<8x128xf32>
    %c6_93 = arith.constant 6 : index
    %c2_94 = arith.constant 2 : index
    %195 = memref.load %arg4[%c6_93, %c2_94] : memref<8x8xf32, #tpu.memory_space<smem>>
    %196 = vector.broadcast %195 : f32 to vector<8x128xf32>
    %197 = arith.mulf %87, %196 : vector<8x128xf32>
    %198 = arith.addf %194, %197 : vector<8x128xf32>
    %c7_95 = arith.constant 7 : index
    %c2_96 = arith.constant 2 : index
    %199 = memref.load %arg4[%c7_95, %c2_96] : memref<8x8xf32, #tpu.memory_space<smem>>
    %200 = vector.broadcast %199 : f32 to vector<8x128xf32>
    %201 = arith.mulf %99, %200 : vector<8x128xf32>
    %202 = arith.addf %198, %201 : vector<8x128xf32>
    %c2_97 = arith.constant 2 : index
    %203 = memref.load %arg5[%c2_97] : memref<8xf32, #tpu.memory_space<smem>>
    %204 = vector.broadcast %203 : f32 to vector<8x128xf32>
    %205 = arith.addf %202, %204 : vector<8x128xf32>
    %cst_98 = arith.constant 0.000000e+00 : f32
    %206 = vector.broadcast %cst_98 : f32 to vector<8x128xf32>
    %207 = arith.maximumf %205, %206 : vector<8x128xf32>
    %c0_99 = arith.constant 0 : index
    %c3_100 = arith.constant 3 : index
    %208 = memref.load %arg4[%c0_99, %c3_100] : memref<8x8xf32, #tpu.memory_space<smem>>
    %209 = vector.broadcast %208 : f32 to vector<8x128xf32>
    %210 = arith.mulf %15, %209 : vector<8x128xf32>
    %c1_101 = arith.constant 1 : index
    %c3_102 = arith.constant 3 : index
    %211 = memref.load %arg4[%c1_101, %c3_102] : memref<8x8xf32, #tpu.memory_space<smem>>
    %212 = vector.broadcast %211 : f32 to vector<8x128xf32>
    %213 = arith.mulf %27, %212 : vector<8x128xf32>
    %214 = arith.addf %210, %213 : vector<8x128xf32>
    %c2_103 = arith.constant 2 : index
    %c3_104 = arith.constant 3 : index
    %215 = memref.load %arg4[%c2_103, %c3_104] : memref<8x8xf32, #tpu.memory_space<smem>>
    %216 = vector.broadcast %215 : f32 to vector<8x128xf32>
    %217 = arith.mulf %39, %216 : vector<8x128xf32>
    %218 = arith.addf %214, %217 : vector<8x128xf32>
    %c3_105 = arith.constant 3 : index
    %c3_106 = arith.constant 3 : index
    %219 = memref.load %arg4[%c3_105, %c3_106] : memref<8x8xf32, #tpu.memory_space<smem>>
    %220 = vector.broadcast %219 : f32 to vector<8x128xf32>
    %221 = arith.mulf %51, %220 : vector<8x128xf32>
    %222 = arith.addf %218, %221 : vector<8x128xf32>
    %c4_107 = arith.constant 4 : index
    %c3_108 = arith.constant 3 : index
    %223 = memref.load %arg4[%c4_107, %c3_108] : memref<8x8xf32, #tpu.memory_space<smem>>
    %224 = vector.broadcast %223 : f32 to vector<8x128xf32>
    %225 = arith.mulf %63, %224 : vector<8x128xf32>
    %226 = arith.addf %222, %225 : vector<8x128xf32>
    %c5_109 = arith.constant 5 : index
    %c3_110 = arith.constant 3 : index
    %227 = memref.load %arg4[%c5_109, %c3_110] : memref<8x8xf32, #tpu.memory_space<smem>>
    %228 = vector.broadcast %227 : f32 to vector<8x128xf32>
    %229 = arith.mulf %75, %228 : vector<8x128xf32>
    %230 = arith.addf %226, %229 : vector<8x128xf32>
    %c6_111 = arith.constant 6 : index
    %c3_112 = arith.constant 3 : index
    %231 = memref.load %arg4[%c6_111, %c3_112] : memref<8x8xf32, #tpu.memory_space<smem>>
    %232 = vector.broadcast %231 : f32 to vector<8x128xf32>
    %233 = arith.mulf %87, %232 : vector<8x128xf32>
    %234 = arith.addf %230, %233 : vector<8x128xf32>
    %c7_113 = arith.constant 7 : index
    %c3_114 = arith.constant 3 : index
    %235 = memref.load %arg4[%c7_113, %c3_114] : memref<8x8xf32, #tpu.memory_space<smem>>
    %236 = vector.broadcast %235 : f32 to vector<8x128xf32>
    %237 = arith.mulf %99, %236 : vector<8x128xf32>
    %238 = arith.addf %234, %237 : vector<8x128xf32>
    %c3_115 = arith.constant 3 : index
    %239 = memref.load %arg5[%c3_115] : memref<8xf32, #tpu.memory_space<smem>>
    %240 = vector.broadcast %239 : f32 to vector<8x128xf32>
    %241 = arith.addf %238, %240 : vector<8x128xf32>
    %cst_116 = arith.constant 0.000000e+00 : f32
    %242 = vector.broadcast %cst_116 : f32 to vector<8x128xf32>
    %243 = arith.maximumf %241, %242 : vector<8x128xf32>
    %c0_117 = arith.constant 0 : index
    %c4_118 = arith.constant 4 : index
    %244 = memref.load %arg4[%c0_117, %c4_118] : memref<8x8xf32, #tpu.memory_space<smem>>
    %245 = vector.broadcast %244 : f32 to vector<8x128xf32>
    %246 = arith.mulf %15, %245 : vector<8x128xf32>
    %c1_119 = arith.constant 1 : index
    %c4_120 = arith.constant 4 : index
    %247 = memref.load %arg4[%c1_119, %c4_120] : memref<8x8xf32, #tpu.memory_space<smem>>
    %248 = vector.broadcast %247 : f32 to vector<8x128xf32>
    %249 = arith.mulf %27, %248 : vector<8x128xf32>
    %250 = arith.addf %246, %249 : vector<8x128xf32>
    %c2_121 = arith.constant 2 : index
    %c4_122 = arith.constant 4 : index
    %251 = memref.load %arg4[%c2_121, %c4_122] : memref<8x8xf32, #tpu.memory_space<smem>>
    %252 = vector.broadcast %251 : f32 to vector<8x128xf32>
    %253 = arith.mulf %39, %252 : vector<8x128xf32>
    %254 = arith.addf %250, %253 : vector<8x128xf32>
    %c3_123 = arith.constant 3 : index
    %c4_124 = arith.constant 4 : index
    %255 = memref.load %arg4[%c3_123, %c4_124] : memref<8x8xf32, #tpu.memory_space<smem>>
    %256 = vector.broadcast %255 : f32 to vector<8x128xf32>
    %257 = arith.mulf %51, %256 : vector<8x128xf32>
    %258 = arith.addf %254, %257 : vector<8x128xf32>
    %c4_125 = arith.constant 4 : index
    %c4_126 = arith.constant 4 : index
    %259 = memref.load %arg4[%c4_125, %c4_126] : memref<8x8xf32, #tpu.memory_space<smem>>
    %260 = vector.broadcast %259 : f32 to vector<8x128xf32>
    %261 = arith.mulf %63, %260 : vector<8x128xf32>
    %262 = arith.addf %258, %261 : vector<8x128xf32>
    %c5_127 = arith.constant 5 : index
    %c4_128 = arith.constant 4 : index
    %263 = memref.load %arg4[%c5_127, %c4_128] : memref<8x8xf32, #tpu.memory_space<smem>>
    %264 = vector.broadcast %263 : f32 to vector<8x128xf32>
    %265 = arith.mulf %75, %264 : vector<8x128xf32>
    %266 = arith.addf %262, %265 : vector<8x128xf32>
    %c6_129 = arith.constant 6 : index
    %c4_130 = arith.constant 4 : index
    %267 = memref.load %arg4[%c6_129, %c4_130] : memref<8x8xf32, #tpu.memory_space<smem>>
    %268 = vector.broadcast %267 : f32 to vector<8x128xf32>
    %269 = arith.mulf %87, %268 : vector<8x128xf32>
    %270 = arith.addf %266, %269 : vector<8x128xf32>
    %c7_131 = arith.constant 7 : index
    %c4_132 = arith.constant 4 : index
    %271 = memref.load %arg4[%c7_131, %c4_132] : memref<8x8xf32, #tpu.memory_space<smem>>
    %272 = vector.broadcast %271 : f32 to vector<8x128xf32>
    %273 = arith.mulf %99, %272 : vector<8x128xf32>
    %274 = arith.addf %270, %273 : vector<8x128xf32>
    %c4_133 = arith.constant 4 : index
    %275 = memref.load %arg5[%c4_133] : memref<8xf32, #tpu.memory_space<smem>>
    %276 = vector.broadcast %275 : f32 to vector<8x128xf32>
    %277 = arith.addf %274, %276 : vector<8x128xf32>
    %cst_134 = arith.constant 0.000000e+00 : f32
    %278 = vector.broadcast %cst_134 : f32 to vector<8x128xf32>
    %279 = arith.maximumf %277, %278 : vector<8x128xf32>
    %c0_135 = arith.constant 0 : index
    %c5_136 = arith.constant 5 : index
    %280 = memref.load %arg4[%c0_135, %c5_136] : memref<8x8xf32, #tpu.memory_space<smem>>
    %281 = vector.broadcast %280 : f32 to vector<8x128xf32>
    %282 = arith.mulf %15, %281 : vector<8x128xf32>
    %c1_137 = arith.constant 1 : index
    %c5_138 = arith.constant 5 : index
    %283 = memref.load %arg4[%c1_137, %c5_138] : memref<8x8xf32, #tpu.memory_space<smem>>
    %284 = vector.broadcast %283 : f32 to vector<8x128xf32>
    %285 = arith.mulf %27, %284 : vector<8x128xf32>
    %286 = arith.addf %282, %285 : vector<8x128xf32>
    %c2_139 = arith.constant 2 : index
    %c5_140 = arith.constant 5 : index
    %287 = memref.load %arg4[%c2_139, %c5_140] : memref<8x8xf32, #tpu.memory_space<smem>>
    %288 = vector.broadcast %287 : f32 to vector<8x128xf32>
    %289 = arith.mulf %39, %288 : vector<8x128xf32>
    %290 = arith.addf %286, %289 : vector<8x128xf32>
    %c3_141 = arith.constant 3 : index
    %c5_142 = arith.constant 5 : index
    %291 = memref.load %arg4[%c3_141, %c5_142] : memref<8x8xf32, #tpu.memory_space<smem>>
    %292 = vector.broadcast %291 : f32 to vector<8x128xf32>
    %293 = arith.mulf %51, %292 : vector<8x128xf32>
    %294 = arith.addf %290, %293 : vector<8x128xf32>
    %c4_143 = arith.constant 4 : index
    %c5_144 = arith.constant 5 : index
    %295 = memref.load %arg4[%c4_143, %c5_144] : memref<8x8xf32, #tpu.memory_space<smem>>
    %296 = vector.broadcast %295 : f32 to vector<8x128xf32>
    %297 = arith.mulf %63, %296 : vector<8x128xf32>
    %298 = arith.addf %294, %297 : vector<8x128xf32>
    %c5_145 = arith.constant 5 : index
    %c5_146 = arith.constant 5 : index
    %299 = memref.load %arg4[%c5_145, %c5_146] : memref<8x8xf32, #tpu.memory_space<smem>>
    %300 = vector.broadcast %299 : f32 to vector<8x128xf32>
    %301 = arith.mulf %75, %300 : vector<8x128xf32>
    %302 = arith.addf %298, %301 : vector<8x128xf32>
    %c6_147 = arith.constant 6 : index
    %c5_148 = arith.constant 5 : index
    %303 = memref.load %arg4[%c6_147, %c5_148] : memref<8x8xf32, #tpu.memory_space<smem>>
    %304 = vector.broadcast %303 : f32 to vector<8x128xf32>
    %305 = arith.mulf %87, %304 : vector<8x128xf32>
    %306 = arith.addf %302, %305 : vector<8x128xf32>
    %c7_149 = arith.constant 7 : index
    %c5_150 = arith.constant 5 : index
    %307 = memref.load %arg4[%c7_149, %c5_150] : memref<8x8xf32, #tpu.memory_space<smem>>
    %308 = vector.broadcast %307 : f32 to vector<8x128xf32>
    %309 = arith.mulf %99, %308 : vector<8x128xf32>
    %310 = arith.addf %306, %309 : vector<8x128xf32>
    %c5_151 = arith.constant 5 : index
    %311 = memref.load %arg5[%c5_151] : memref<8xf32, #tpu.memory_space<smem>>
    %312 = vector.broadcast %311 : f32 to vector<8x128xf32>
    %313 = arith.addf %310, %312 : vector<8x128xf32>
    %cst_152 = arith.constant 0.000000e+00 : f32
    %314 = vector.broadcast %cst_152 : f32 to vector<8x128xf32>
    %315 = arith.maximumf %313, %314 : vector<8x128xf32>
    %c0_153 = arith.constant 0 : index
    %c6_154 = arith.constant 6 : index
    %316 = memref.load %arg4[%c0_153, %c6_154] : memref<8x8xf32, #tpu.memory_space<smem>>
    %317 = vector.broadcast %316 : f32 to vector<8x128xf32>
    %318 = arith.mulf %15, %317 : vector<8x128xf32>
    %c1_155 = arith.constant 1 : index
    %c6_156 = arith.constant 6 : index
    %319 = memref.load %arg4[%c1_155, %c6_156] : memref<8x8xf32, #tpu.memory_space<smem>>
    %320 = vector.broadcast %319 : f32 to vector<8x128xf32>
    %321 = arith.mulf %27, %320 : vector<8x128xf32>
    %322 = arith.addf %318, %321 : vector<8x128xf32>
    %c2_157 = arith.constant 2 : index
    %c6_158 = arith.constant 6 : index
    %323 = memref.load %arg4[%c2_157, %c6_158] : memref<8x8xf32, #tpu.memory_space<smem>>
    %324 = vector.broadcast %323 : f32 to vector<8x128xf32>
    %325 = arith.mulf %39, %324 : vector<8x128xf32>
    %326 = arith.addf %322, %325 : vector<8x128xf32>
    %c3_159 = arith.constant 3 : index
    %c6_160 = arith.constant 6 : index
    %327 = memref.load %arg4[%c3_159, %c6_160] : memref<8x8xf32, #tpu.memory_space<smem>>
    %328 = vector.broadcast %327 : f32 to vector<8x128xf32>
    %329 = arith.mulf %51, %328 : vector<8x128xf32>
    %330 = arith.addf %326, %329 : vector<8x128xf32>
    %c4_161 = arith.constant 4 : index
    %c6_162 = arith.constant 6 : index
    %331 = memref.load %arg4[%c4_161, %c6_162] : memref<8x8xf32, #tpu.memory_space<smem>>
    %332 = vector.broadcast %331 : f32 to vector<8x128xf32>
    %333 = arith.mulf %63, %332 : vector<8x128xf32>
    %334 = arith.addf %330, %333 : vector<8x128xf32>
    %c5_163 = arith.constant 5 : index
    %c6_164 = arith.constant 6 : index
    %335 = memref.load %arg4[%c5_163, %c6_164] : memref<8x8xf32, #tpu.memory_space<smem>>
    %336 = vector.broadcast %335 : f32 to vector<8x128xf32>
    %337 = arith.mulf %75, %336 : vector<8x128xf32>
    %338 = arith.addf %334, %337 : vector<8x128xf32>
    %c6_165 = arith.constant 6 : index
    %c6_166 = arith.constant 6 : index
    %339 = memref.load %arg4[%c6_165, %c6_166] : memref<8x8xf32, #tpu.memory_space<smem>>
    %340 = vector.broadcast %339 : f32 to vector<8x128xf32>
    %341 = arith.mulf %87, %340 : vector<8x128xf32>
    %342 = arith.addf %338, %341 : vector<8x128xf32>
    %c7_167 = arith.constant 7 : index
    %c6_168 = arith.constant 6 : index
    %343 = memref.load %arg4[%c7_167, %c6_168] : memref<8x8xf32, #tpu.memory_space<smem>>
    %344 = vector.broadcast %343 : f32 to vector<8x128xf32>
    %345 = arith.mulf %99, %344 : vector<8x128xf32>
    %346 = arith.addf %342, %345 : vector<8x128xf32>
    %c6_169 = arith.constant 6 : index
    %347 = memref.load %arg5[%c6_169] : memref<8xf32, #tpu.memory_space<smem>>
    %348 = vector.broadcast %347 : f32 to vector<8x128xf32>
    %349 = arith.addf %346, %348 : vector<8x128xf32>
    %cst_170 = arith.constant 0.000000e+00 : f32
    %350 = vector.broadcast %cst_170 : f32 to vector<8x128xf32>
    %351 = arith.maximumf %349, %350 : vector<8x128xf32>
    %c0_171 = arith.constant 0 : index
    %c7_172 = arith.constant 7 : index
    %352 = memref.load %arg4[%c0_171, %c7_172] : memref<8x8xf32, #tpu.memory_space<smem>>
    %353 = vector.broadcast %352 : f32 to vector<8x128xf32>
    %354 = arith.mulf %15, %353 : vector<8x128xf32>
    %c1_173 = arith.constant 1 : index
    %c7_174 = arith.constant 7 : index
    %355 = memref.load %arg4[%c1_173, %c7_174] : memref<8x8xf32, #tpu.memory_space<smem>>
    %356 = vector.broadcast %355 : f32 to vector<8x128xf32>
    %357 = arith.mulf %27, %356 : vector<8x128xf32>
    %358 = arith.addf %354, %357 : vector<8x128xf32>
    %c2_175 = arith.constant 2 : index
    %c7_176 = arith.constant 7 : index
    %359 = memref.load %arg4[%c2_175, %c7_176] : memref<8x8xf32, #tpu.memory_space<smem>>
    %360 = vector.broadcast %359 : f32 to vector<8x128xf32>
    %361 = arith.mulf %39, %360 : vector<8x128xf32>
    %362 = arith.addf %358, %361 : vector<8x128xf32>
    %c3_177 = arith.constant 3 : index
    %c7_178 = arith.constant 7 : index
    %363 = memref.load %arg4[%c3_177, %c7_178] : memref<8x8xf32, #tpu.memory_space<smem>>
    %364 = vector.broadcast %363 : f32 to vector<8x128xf32>
    %365 = arith.mulf %51, %364 : vector<8x128xf32>
    %366 = arith.addf %362, %365 : vector<8x128xf32>
    %c4_179 = arith.constant 4 : index
    %c7_180 = arith.constant 7 : index
    %367 = memref.load %arg4[%c4_179, %c7_180] : memref<8x8xf32, #tpu.memory_space<smem>>
    %368 = vector.broadcast %367 : f32 to vector<8x128xf32>
    %369 = arith.mulf %63, %368 : vector<8x128xf32>
    %370 = arith.addf %366, %369 : vector<8x128xf32>
    %c5_181 = arith.constant 5 : index
    %c7_182 = arith.constant 7 : index
    %371 = memref.load %arg4[%c5_181, %c7_182] : memref<8x8xf32, #tpu.memory_space<smem>>
    %372 = vector.broadcast %371 : f32 to vector<8x128xf32>
    %373 = arith.mulf %75, %372 : vector<8x128xf32>
    %374 = arith.addf %370, %373 : vector<8x128xf32>
    %c6_183 = arith.constant 6 : index
    %c7_184 = arith.constant 7 : index
    %375 = memref.load %arg4[%c6_183, %c7_184] : memref<8x8xf32, #tpu.memory_space<smem>>
    %376 = vector.broadcast %375 : f32 to vector<8x128xf32>
    %377 = arith.mulf %87, %376 : vector<8x128xf32>
    %378 = arith.addf %374, %377 : vector<8x128xf32>
    %c7_185 = arith.constant 7 : index
    %c7_186 = arith.constant 7 : index
    %379 = memref.load %arg4[%c7_185, %c7_186] : memref<8x8xf32, #tpu.memory_space<smem>>
    %380 = vector.broadcast %379 : f32 to vector<8x128xf32>
    %381 = arith.mulf %99, %380 : vector<8x128xf32>
    %382 = arith.addf %378, %381 : vector<8x128xf32>
    %c7_187 = arith.constant 7 : index
    %383 = memref.load %arg5[%c7_187] : memref<8xf32, #tpu.memory_space<smem>>
    %384 = vector.broadcast %383 : f32 to vector<8x128xf32>
    %385 = arith.addf %382, %384 : vector<8x128xf32>
    %cst_188 = arith.constant 0.000000e+00 : f32
    %386 = vector.broadcast %cst_188 : f32 to vector<8x128xf32>
    %387 = arith.maximumf %385, %386 : vector<8x128xf32>
    %c0_189 = arith.constant 0 : index
    %c0_190 = arith.constant 0 : index
    %388 = memref.load %arg6[%c0_189, %c0_190] : memref<8x8xf32, #tpu.memory_space<smem>>
    %389 = vector.broadcast %388 : f32 to vector<8x128xf32>
    %390 = arith.mulf %135, %389 : vector<8x128xf32>
    %c1_191 = arith.constant 1 : index
    %c0_192 = arith.constant 0 : index
    %391 = memref.load %arg6[%c1_191, %c0_192] : memref<8x8xf32, #tpu.memory_space<smem>>
    %392 = vector.broadcast %391 : f32 to vector<8x128xf32>
    %393 = arith.mulf %171, %392 : vector<8x128xf32>
    %394 = arith.addf %390, %393 : vector<8x128xf32>
    %c2_193 = arith.constant 2 : index
    %c0_194 = arith.constant 0 : index
    %395 = memref.load %arg6[%c2_193, %c0_194] : memref<8x8xf32, #tpu.memory_space<smem>>
    %396 = vector.broadcast %395 : f32 to vector<8x128xf32>
    %397 = arith.mulf %207, %396 : vector<8x128xf32>
    %398 = arith.addf %394, %397 : vector<8x128xf32>
    %c3_195 = arith.constant 3 : index
    %c0_196 = arith.constant 0 : index
    %399 = memref.load %arg6[%c3_195, %c0_196] : memref<8x8xf32, #tpu.memory_space<smem>>
    %400 = vector.broadcast %399 : f32 to vector<8x128xf32>
    %401 = arith.mulf %243, %400 : vector<8x128xf32>
    %402 = arith.addf %398, %401 : vector<8x128xf32>
    %c4_197 = arith.constant 4 : index
    %c0_198 = arith.constant 0 : index
    %403 = memref.load %arg6[%c4_197, %c0_198] : memref<8x8xf32, #tpu.memory_space<smem>>
    %404 = vector.broadcast %403 : f32 to vector<8x128xf32>
    %405 = arith.mulf %279, %404 : vector<8x128xf32>
    %406 = arith.addf %402, %405 : vector<8x128xf32>
    %c5_199 = arith.constant 5 : index
    %c0_200 = arith.constant 0 : index
    %407 = memref.load %arg6[%c5_199, %c0_200] : memref<8x8xf32, #tpu.memory_space<smem>>
    %408 = vector.broadcast %407 : f32 to vector<8x128xf32>
    %409 = arith.mulf %315, %408 : vector<8x128xf32>
    %410 = arith.addf %406, %409 : vector<8x128xf32>
    %c6_201 = arith.constant 6 : index
    %c0_202 = arith.constant 0 : index
    %411 = memref.load %arg6[%c6_201, %c0_202] : memref<8x8xf32, #tpu.memory_space<smem>>
    %412 = vector.broadcast %411 : f32 to vector<8x128xf32>
    %413 = arith.mulf %351, %412 : vector<8x128xf32>
    %414 = arith.addf %410, %413 : vector<8x128xf32>
    %c7_203 = arith.constant 7 : index
    %c0_204 = arith.constant 0 : index
    %415 = memref.load %arg6[%c7_203, %c0_204] : memref<8x8xf32, #tpu.memory_space<smem>>
    %416 = vector.broadcast %415 : f32 to vector<8x128xf32>
    %417 = arith.mulf %387, %416 : vector<8x128xf32>
    %418 = arith.addf %414, %417 : vector<8x128xf32>
    %c0_205 = arith.constant 0 : index
    %419 = memref.load %arg7[%c0_205] : memref<8xf32, #tpu.memory_space<smem>>
    %420 = vector.broadcast %419 : f32 to vector<8x128xf32>
    %421 = arith.addf %418, %420 : vector<8x128xf32>
    %cst_206 = arith.constant 0.000000e+00 : f32
    %422 = vector.broadcast %cst_206 : f32 to vector<8x128xf32>
    %423 = arith.maximumf %421, %422 : vector<8x128xf32>
    %c0_207 = arith.constant 0 : index
    %c1_208 = arith.constant 1 : index
    %424 = memref.load %arg6[%c0_207, %c1_208] : memref<8x8xf32, #tpu.memory_space<smem>>
    %425 = vector.broadcast %424 : f32 to vector<8x128xf32>
    %426 = arith.mulf %135, %425 : vector<8x128xf32>
    %c1_209 = arith.constant 1 : index
    %c1_210 = arith.constant 1 : index
    %427 = memref.load %arg6[%c1_209, %c1_210] : memref<8x8xf32, #tpu.memory_space<smem>>
    %428 = vector.broadcast %427 : f32 to vector<8x128xf32>
    %429 = arith.mulf %171, %428 : vector<8x128xf32>
    %430 = arith.addf %426, %429 : vector<8x128xf32>
    %c2_211 = arith.constant 2 : index
    %c1_212 = arith.constant 1 : index
    %431 = memref.load %arg6[%c2_211, %c1_212] : memref<8x8xf32, #tpu.memory_space<smem>>
    %432 = vector.broadcast %431 : f32 to vector<8x128xf32>
    %433 = arith.mulf %207, %432 : vector<8x128xf32>
    %434 = arith.addf %430, %433 : vector<8x128xf32>
    %c3_213 = arith.constant 3 : index
    %c1_214 = arith.constant 1 : index
    %435 = memref.load %arg6[%c3_213, %c1_214] : memref<8x8xf32, #tpu.memory_space<smem>>
    %436 = vector.broadcast %435 : f32 to vector<8x128xf32>
    %437 = arith.mulf %243, %436 : vector<8x128xf32>
    %438 = arith.addf %434, %437 : vector<8x128xf32>
    %c4_215 = arith.constant 4 : index
    %c1_216 = arith.constant 1 : index
    %439 = memref.load %arg6[%c4_215, %c1_216] : memref<8x8xf32, #tpu.memory_space<smem>>
    %440 = vector.broadcast %439 : f32 to vector<8x128xf32>
    %441 = arith.mulf %279, %440 : vector<8x128xf32>
    %442 = arith.addf %438, %441 : vector<8x128xf32>
    %c5_217 = arith.constant 5 : index
    %c1_218 = arith.constant 1 : index
    %443 = memref.load %arg6[%c5_217, %c1_218] : memref<8x8xf32, #tpu.memory_space<smem>>
    %444 = vector.broadcast %443 : f32 to vector<8x128xf32>
    %445 = arith.mulf %315, %444 : vector<8x128xf32>
    %446 = arith.addf %442, %445 : vector<8x128xf32>
    %c6_219 = arith.constant 6 : index
    %c1_220 = arith.constant 1 : index
    %447 = memref.load %arg6[%c6_219, %c1_220] : memref<8x8xf32, #tpu.memory_space<smem>>
    %448 = vector.broadcast %447 : f32 to vector<8x128xf32>
    %449 = arith.mulf %351, %448 : vector<8x128xf32>
    %450 = arith.addf %446, %449 : vector<8x128xf32>
    %c7_221 = arith.constant 7 : index
    %c1_222 = arith.constant 1 : index
    %451 = memref.load %arg6[%c7_221, %c1_222] : memref<8x8xf32, #tpu.memory_space<smem>>
    %452 = vector.broadcast %451 : f32 to vector<8x128xf32>
    %453 = arith.mulf %387, %452 : vector<8x128xf32>
    %454 = arith.addf %450, %453 : vector<8x128xf32>
    %c1_223 = arith.constant 1 : index
    %455 = memref.load %arg7[%c1_223] : memref<8xf32, #tpu.memory_space<smem>>
    %456 = vector.broadcast %455 : f32 to vector<8x128xf32>
    %457 = arith.addf %454, %456 : vector<8x128xf32>
    %cst_224 = arith.constant 0.000000e+00 : f32
    %458 = vector.broadcast %cst_224 : f32 to vector<8x128xf32>
    %459 = arith.maximumf %457, %458 : vector<8x128xf32>
    %c0_225 = arith.constant 0 : index
    %c2_226 = arith.constant 2 : index
    %460 = memref.load %arg6[%c0_225, %c2_226] : memref<8x8xf32, #tpu.memory_space<smem>>
    %461 = vector.broadcast %460 : f32 to vector<8x128xf32>
    %462 = arith.mulf %135, %461 : vector<8x128xf32>
    %c1_227 = arith.constant 1 : index
    %c2_228 = arith.constant 2 : index
    %463 = memref.load %arg6[%c1_227, %c2_228] : memref<8x8xf32, #tpu.memory_space<smem>>
    %464 = vector.broadcast %463 : f32 to vector<8x128xf32>
    %465 = arith.mulf %171, %464 : vector<8x128xf32>
    %466 = arith.addf %462, %465 : vector<8x128xf32>
    %c2_229 = arith.constant 2 : index
    %c2_230 = arith.constant 2 : index
    %467 = memref.load %arg6[%c2_229, %c2_230] : memref<8x8xf32, #tpu.memory_space<smem>>
    %468 = vector.broadcast %467 : f32 to vector<8x128xf32>
    %469 = arith.mulf %207, %468 : vector<8x128xf32>
    %470 = arith.addf %466, %469 : vector<8x128xf32>
    %c3_231 = arith.constant 3 : index
    %c2_232 = arith.constant 2 : index
    %471 = memref.load %arg6[%c3_231, %c2_232] : memref<8x8xf32, #tpu.memory_space<smem>>
    %472 = vector.broadcast %471 : f32 to vector<8x128xf32>
    %473 = arith.mulf %243, %472 : vector<8x128xf32>
    %474 = arith.addf %470, %473 : vector<8x128xf32>
    %c4_233 = arith.constant 4 : index
    %c2_234 = arith.constant 2 : index
    %475 = memref.load %arg6[%c4_233, %c2_234] : memref<8x8xf32, #tpu.memory_space<smem>>
    %476 = vector.broadcast %475 : f32 to vector<8x128xf32>
    %477 = arith.mulf %279, %476 : vector<8x128xf32>
    %478 = arith.addf %474, %477 : vector<8x128xf32>
    %c5_235 = arith.constant 5 : index
    %c2_236 = arith.constant 2 : index
    %479 = memref.load %arg6[%c5_235, %c2_236] : memref<8x8xf32, #tpu.memory_space<smem>>
    %480 = vector.broadcast %479 : f32 to vector<8x128xf32>
    %481 = arith.mulf %315, %480 : vector<8x128xf32>
    %482 = arith.addf %478, %481 : vector<8x128xf32>
    %c6_237 = arith.constant 6 : index
    %c2_238 = arith.constant 2 : index
    %483 = memref.load %arg6[%c6_237, %c2_238] : memref<8x8xf32, #tpu.memory_space<smem>>
    %484 = vector.broadcast %483 : f32 to vector<8x128xf32>
    %485 = arith.mulf %351, %484 : vector<8x128xf32>
    %486 = arith.addf %482, %485 : vector<8x128xf32>
    %c7_239 = arith.constant 7 : index
    %c2_240 = arith.constant 2 : index
    %487 = memref.load %arg6[%c7_239, %c2_240] : memref<8x8xf32, #tpu.memory_space<smem>>
    %488 = vector.broadcast %487 : f32 to vector<8x128xf32>
    %489 = arith.mulf %387, %488 : vector<8x128xf32>
    %490 = arith.addf %486, %489 : vector<8x128xf32>
    %c2_241 = arith.constant 2 : index
    %491 = memref.load %arg7[%c2_241] : memref<8xf32, #tpu.memory_space<smem>>
    %492 = vector.broadcast %491 : f32 to vector<8x128xf32>
    %493 = arith.addf %490, %492 : vector<8x128xf32>
    %cst_242 = arith.constant 0.000000e+00 : f32
    %494 = vector.broadcast %cst_242 : f32 to vector<8x128xf32>
    %495 = arith.maximumf %493, %494 : vector<8x128xf32>
    %c0_243 = arith.constant 0 : index
    %c3_244 = arith.constant 3 : index
    %496 = memref.load %arg6[%c0_243, %c3_244] : memref<8x8xf32, #tpu.memory_space<smem>>
    %497 = vector.broadcast %496 : f32 to vector<8x128xf32>
    %498 = arith.mulf %135, %497 : vector<8x128xf32>
    %c1_245 = arith.constant 1 : index
    %c3_246 = arith.constant 3 : index
    %499 = memref.load %arg6[%c1_245, %c3_246] : memref<8x8xf32, #tpu.memory_space<smem>>
    %500 = vector.broadcast %499 : f32 to vector<8x128xf32>
    %501 = arith.mulf %171, %500 : vector<8x128xf32>
    %502 = arith.addf %498, %501 : vector<8x128xf32>
    %c2_247 = arith.constant 2 : index
    %c3_248 = arith.constant 3 : index
    %503 = memref.load %arg6[%c2_247, %c3_248] : memref<8x8xf32, #tpu.memory_space<smem>>
    %504 = vector.broadcast %503 : f32 to vector<8x128xf32>
    %505 = arith.mulf %207, %504 : vector<8x128xf32>
    %506 = arith.addf %502, %505 : vector<8x128xf32>
    %c3_249 = arith.constant 3 : index
    %c3_250 = arith.constant 3 : index
    %507 = memref.load %arg6[%c3_249, %c3_250] : memref<8x8xf32, #tpu.memory_space<smem>>
    %508 = vector.broadcast %507 : f32 to vector<8x128xf32>
    %509 = arith.mulf %243, %508 : vector<8x128xf32>
    %510 = arith.addf %506, %509 : vector<8x128xf32>
    %c4_251 = arith.constant 4 : index
    %c3_252 = arith.constant 3 : index
    %511 = memref.load %arg6[%c4_251, %c3_252] : memref<8x8xf32, #tpu.memory_space<smem>>
    %512 = vector.broadcast %511 : f32 to vector<8x128xf32>
    %513 = arith.mulf %279, %512 : vector<8x128xf32>
    %514 = arith.addf %510, %513 : vector<8x128xf32>
    %c5_253 = arith.constant 5 : index
    %c3_254 = arith.constant 3 : index
    %515 = memref.load %arg6[%c5_253, %c3_254] : memref<8x8xf32, #tpu.memory_space<smem>>
    %516 = vector.broadcast %515 : f32 to vector<8x128xf32>
    %517 = arith.mulf %315, %516 : vector<8x128xf32>
    %518 = arith.addf %514, %517 : vector<8x128xf32>
    %c6_255 = arith.constant 6 : index
    %c3_256 = arith.constant 3 : index
    %519 = memref.load %arg6[%c6_255, %c3_256] : memref<8x8xf32, #tpu.memory_space<smem>>
    %520 = vector.broadcast %519 : f32 to vector<8x128xf32>
    %521 = arith.mulf %351, %520 : vector<8x128xf32>
    %522 = arith.addf %518, %521 : vector<8x128xf32>
    %c7_257 = arith.constant 7 : index
    %c3_258 = arith.constant 3 : index
    %523 = memref.load %arg6[%c7_257, %c3_258] : memref<8x8xf32, #tpu.memory_space<smem>>
    %524 = vector.broadcast %523 : f32 to vector<8x128xf32>
    %525 = arith.mulf %387, %524 : vector<8x128xf32>
    %526 = arith.addf %522, %525 : vector<8x128xf32>
    %c3_259 = arith.constant 3 : index
    %527 = memref.load %arg7[%c3_259] : memref<8xf32, #tpu.memory_space<smem>>
    %528 = vector.broadcast %527 : f32 to vector<8x128xf32>
    %529 = arith.addf %526, %528 : vector<8x128xf32>
    %cst_260 = arith.constant 0.000000e+00 : f32
    %530 = vector.broadcast %cst_260 : f32 to vector<8x128xf32>
    %531 = arith.maximumf %529, %530 : vector<8x128xf32>
    %c0_261 = arith.constant 0 : index
    %c4_262 = arith.constant 4 : index
    %532 = memref.load %arg6[%c0_261, %c4_262] : memref<8x8xf32, #tpu.memory_space<smem>>
    %533 = vector.broadcast %532 : f32 to vector<8x128xf32>
    %534 = arith.mulf %135, %533 : vector<8x128xf32>
    %c1_263 = arith.constant 1 : index
    %c4_264 = arith.constant 4 : index
    %535 = memref.load %arg6[%c1_263, %c4_264] : memref<8x8xf32, #tpu.memory_space<smem>>
    %536 = vector.broadcast %535 : f32 to vector<8x128xf32>
    %537 = arith.mulf %171, %536 : vector<8x128xf32>
    %538 = arith.addf %534, %537 : vector<8x128xf32>
    %c2_265 = arith.constant 2 : index
    %c4_266 = arith.constant 4 : index
    %539 = memref.load %arg6[%c2_265, %c4_266] : memref<8x8xf32, #tpu.memory_space<smem>>
    %540 = vector.broadcast %539 : f32 to vector<8x128xf32>
    %541 = arith.mulf %207, %540 : vector<8x128xf32>
    %542 = arith.addf %538, %541 : vector<8x128xf32>
    %c3_267 = arith.constant 3 : index
    %c4_268 = arith.constant 4 : index
    %543 = memref.load %arg6[%c3_267, %c4_268] : memref<8x8xf32, #tpu.memory_space<smem>>
    %544 = vector.broadcast %543 : f32 to vector<8x128xf32>
    %545 = arith.mulf %243, %544 : vector<8x128xf32>
    %546 = arith.addf %542, %545 : vector<8x128xf32>
    %c4_269 = arith.constant 4 : index
    %c4_270 = arith.constant 4 : index
    %547 = memref.load %arg6[%c4_269, %c4_270] : memref<8x8xf32, #tpu.memory_space<smem>>
    %548 = vector.broadcast %547 : f32 to vector<8x128xf32>
    %549 = arith.mulf %279, %548 : vector<8x128xf32>
    %550 = arith.addf %546, %549 : vector<8x128xf32>
    %c5_271 = arith.constant 5 : index
    %c4_272 = arith.constant 4 : index
    %551 = memref.load %arg6[%c5_271, %c4_272] : memref<8x8xf32, #tpu.memory_space<smem>>
    %552 = vector.broadcast %551 : f32 to vector<8x128xf32>
    %553 = arith.mulf %315, %552 : vector<8x128xf32>
    %554 = arith.addf %550, %553 : vector<8x128xf32>
    %c6_273 = arith.constant 6 : index
    %c4_274 = arith.constant 4 : index
    %555 = memref.load %arg6[%c6_273, %c4_274] : memref<8x8xf32, #tpu.memory_space<smem>>
    %556 = vector.broadcast %555 : f32 to vector<8x128xf32>
    %557 = arith.mulf %351, %556 : vector<8x128xf32>
    %558 = arith.addf %554, %557 : vector<8x128xf32>
    %c7_275 = arith.constant 7 : index
    %c4_276 = arith.constant 4 : index
    %559 = memref.load %arg6[%c7_275, %c4_276] : memref<8x8xf32, #tpu.memory_space<smem>>
    %560 = vector.broadcast %559 : f32 to vector<8x128xf32>
    %561 = arith.mulf %387, %560 : vector<8x128xf32>
    %562 = arith.addf %558, %561 : vector<8x128xf32>
    %c4_277 = arith.constant 4 : index
    %563 = memref.load %arg7[%c4_277] : memref<8xf32, #tpu.memory_space<smem>>
    %564 = vector.broadcast %563 : f32 to vector<8x128xf32>
    %565 = arith.addf %562, %564 : vector<8x128xf32>
    %cst_278 = arith.constant 0.000000e+00 : f32
    %566 = vector.broadcast %cst_278 : f32 to vector<8x128xf32>
    %567 = arith.maximumf %565, %566 : vector<8x128xf32>
    %c0_279 = arith.constant 0 : index
    %c5_280 = arith.constant 5 : index
    %568 = memref.load %arg6[%c0_279, %c5_280] : memref<8x8xf32, #tpu.memory_space<smem>>
    %569 = vector.broadcast %568 : f32 to vector<8x128xf32>
    %570 = arith.mulf %135, %569 : vector<8x128xf32>
    %c1_281 = arith.constant 1 : index
    %c5_282 = arith.constant 5 : index
    %571 = memref.load %arg6[%c1_281, %c5_282] : memref<8x8xf32, #tpu.memory_space<smem>>
    %572 = vector.broadcast %571 : f32 to vector<8x128xf32>
    %573 = arith.mulf %171, %572 : vector<8x128xf32>
    %574 = arith.addf %570, %573 : vector<8x128xf32>
    %c2_283 = arith.constant 2 : index
    %c5_284 = arith.constant 5 : index
    %575 = memref.load %arg6[%c2_283, %c5_284] : memref<8x8xf32, #tpu.memory_space<smem>>
    %576 = vector.broadcast %575 : f32 to vector<8x128xf32>
    %577 = arith.mulf %207, %576 : vector<8x128xf32>
    %578 = arith.addf %574, %577 : vector<8x128xf32>
    %c3_285 = arith.constant 3 : index
    %c5_286 = arith.constant 5 : index
    %579 = memref.load %arg6[%c3_285, %c5_286] : memref<8x8xf32, #tpu.memory_space<smem>>
    %580 = vector.broadcast %579 : f32 to vector<8x128xf32>
    %581 = arith.mulf %243, %580 : vector<8x128xf32>
    %582 = arith.addf %578, %581 : vector<8x128xf32>
    %c4_287 = arith.constant 4 : index
    %c5_288 = arith.constant 5 : index
    %583 = memref.load %arg6[%c4_287, %c5_288] : memref<8x8xf32, #tpu.memory_space<smem>>
    %584 = vector.broadcast %583 : f32 to vector<8x128xf32>
    %585 = arith.mulf %279, %584 : vector<8x128xf32>
    %586 = arith.addf %582, %585 : vector<8x128xf32>
    %c5_289 = arith.constant 5 : index
    %c5_290 = arith.constant 5 : index
    %587 = memref.load %arg6[%c5_289, %c5_290] : memref<8x8xf32, #tpu.memory_space<smem>>
    %588 = vector.broadcast %587 : f32 to vector<8x128xf32>
    %589 = arith.mulf %315, %588 : vector<8x128xf32>
    %590 = arith.addf %586, %589 : vector<8x128xf32>
    %c6_291 = arith.constant 6 : index
    %c5_292 = arith.constant 5 : index
    %591 = memref.load %arg6[%c6_291, %c5_292] : memref<8x8xf32, #tpu.memory_space<smem>>
    %592 = vector.broadcast %591 : f32 to vector<8x128xf32>
    %593 = arith.mulf %351, %592 : vector<8x128xf32>
    %594 = arith.addf %590, %593 : vector<8x128xf32>
    %c7_293 = arith.constant 7 : index
    %c5_294 = arith.constant 5 : index
    %595 = memref.load %arg6[%c7_293, %c5_294] : memref<8x8xf32, #tpu.memory_space<smem>>
    %596 = vector.broadcast %595 : f32 to vector<8x128xf32>
    %597 = arith.mulf %387, %596 : vector<8x128xf32>
    %598 = arith.addf %594, %597 : vector<8x128xf32>
    %c5_295 = arith.constant 5 : index
    %599 = memref.load %arg7[%c5_295] : memref<8xf32, #tpu.memory_space<smem>>
    %600 = vector.broadcast %599 : f32 to vector<8x128xf32>
    %601 = arith.addf %598, %600 : vector<8x128xf32>
    %cst_296 = arith.constant 0.000000e+00 : f32
    %602 = vector.broadcast %cst_296 : f32 to vector<8x128xf32>
    %603 = arith.maximumf %601, %602 : vector<8x128xf32>
    %c0_297 = arith.constant 0 : index
    %c6_298 = arith.constant 6 : index
    %604 = memref.load %arg6[%c0_297, %c6_298] : memref<8x8xf32, #tpu.memory_space<smem>>
    %605 = vector.broadcast %604 : f32 to vector<8x128xf32>
    %606 = arith.mulf %135, %605 : vector<8x128xf32>
    %c1_299 = arith.constant 1 : index
    %c6_300 = arith.constant 6 : index
    %607 = memref.load %arg6[%c1_299, %c6_300] : memref<8x8xf32, #tpu.memory_space<smem>>
    %608 = vector.broadcast %607 : f32 to vector<8x128xf32>
    %609 = arith.mulf %171, %608 : vector<8x128xf32>
    %610 = arith.addf %606, %609 : vector<8x128xf32>
    %c2_301 = arith.constant 2 : index
    %c6_302 = arith.constant 6 : index
    %611 = memref.load %arg6[%c2_301, %c6_302] : memref<8x8xf32, #tpu.memory_space<smem>>
    %612 = vector.broadcast %611 : f32 to vector<8x128xf32>
    %613 = arith.mulf %207, %612 : vector<8x128xf32>
    %614 = arith.addf %610, %613 : vector<8x128xf32>
    %c3_303 = arith.constant 3 : index
    %c6_304 = arith.constant 6 : index
    %615 = memref.load %arg6[%c3_303, %c6_304] : memref<8x8xf32, #tpu.memory_space<smem>>
    %616 = vector.broadcast %615 : f32 to vector<8x128xf32>
    %617 = arith.mulf %243, %616 : vector<8x128xf32>
    %618 = arith.addf %614, %617 : vector<8x128xf32>
    %c4_305 = arith.constant 4 : index
    %c6_306 = arith.constant 6 : index
    %619 = memref.load %arg6[%c4_305, %c6_306] : memref<8x8xf32, #tpu.memory_space<smem>>
    %620 = vector.broadcast %619 : f32 to vector<8x128xf32>
    %621 = arith.mulf %279, %620 : vector<8x128xf32>
    %622 = arith.addf %618, %621 : vector<8x128xf32>
    %c5_307 = arith.constant 5 : index
    %c6_308 = arith.constant 6 : index
    %623 = memref.load %arg6[%c5_307, %c6_308] : memref<8x8xf32, #tpu.memory_space<smem>>
    %624 = vector.broadcast %623 : f32 to vector<8x128xf32>
    %625 = arith.mulf %315, %624 : vector<8x128xf32>
    %626 = arith.addf %622, %625 : vector<8x128xf32>
    %c6_309 = arith.constant 6 : index
    %c6_310 = arith.constant 6 : index
    %627 = memref.load %arg6[%c6_309, %c6_310] : memref<8x8xf32, #tpu.memory_space<smem>>
    %628 = vector.broadcast %627 : f32 to vector<8x128xf32>
    %629 = arith.mulf %351, %628 : vector<8x128xf32>
    %630 = arith.addf %626, %629 : vector<8x128xf32>
    %c7_311 = arith.constant 7 : index
    %c6_312 = arith.constant 6 : index
    %631 = memref.load %arg6[%c7_311, %c6_312] : memref<8x8xf32, #tpu.memory_space<smem>>
    %632 = vector.broadcast %631 : f32 to vector<8x128xf32>
    %633 = arith.mulf %387, %632 : vector<8x128xf32>
    %634 = arith.addf %630, %633 : vector<8x128xf32>
    %c6_313 = arith.constant 6 : index
    %635 = memref.load %arg7[%c6_313] : memref<8xf32, #tpu.memory_space<smem>>
    %636 = vector.broadcast %635 : f32 to vector<8x128xf32>
    %637 = arith.addf %634, %636 : vector<8x128xf32>
    %cst_314 = arith.constant 0.000000e+00 : f32
    %638 = vector.broadcast %cst_314 : f32 to vector<8x128xf32>
    %639 = arith.maximumf %637, %638 : vector<8x128xf32>
    %c0_315 = arith.constant 0 : index
    %c7_316 = arith.constant 7 : index
    %640 = memref.load %arg6[%c0_315, %c7_316] : memref<8x8xf32, #tpu.memory_space<smem>>
    %641 = vector.broadcast %640 : f32 to vector<8x128xf32>
    %642 = arith.mulf %135, %641 : vector<8x128xf32>
    %c1_317 = arith.constant 1 : index
    %c7_318 = arith.constant 7 : index
    %643 = memref.load %arg6[%c1_317, %c7_318] : memref<8x8xf32, #tpu.memory_space<smem>>
    %644 = vector.broadcast %643 : f32 to vector<8x128xf32>
    %645 = arith.mulf %171, %644 : vector<8x128xf32>
    %646 = arith.addf %642, %645 : vector<8x128xf32>
    %c2_319 = arith.constant 2 : index
    %c7_320 = arith.constant 7 : index
    %647 = memref.load %arg6[%c2_319, %c7_320] : memref<8x8xf32, #tpu.memory_space<smem>>
    %648 = vector.broadcast %647 : f32 to vector<8x128xf32>
    %649 = arith.mulf %207, %648 : vector<8x128xf32>
    %650 = arith.addf %646, %649 : vector<8x128xf32>
    %c3_321 = arith.constant 3 : index
    %c7_322 = arith.constant 7 : index
    %651 = memref.load %arg6[%c3_321, %c7_322] : memref<8x8xf32, #tpu.memory_space<smem>>
    %652 = vector.broadcast %651 : f32 to vector<8x128xf32>
    %653 = arith.mulf %243, %652 : vector<8x128xf32>
    %654 = arith.addf %650, %653 : vector<8x128xf32>
    %c4_323 = arith.constant 4 : index
    %c7_324 = arith.constant 7 : index
    %655 = memref.load %arg6[%c4_323, %c7_324] : memref<8x8xf32, #tpu.memory_space<smem>>
    %656 = vector.broadcast %655 : f32 to vector<8x128xf32>
    %657 = arith.mulf %279, %656 : vector<8x128xf32>
    %658 = arith.addf %654, %657 : vector<8x128xf32>
    %c5_325 = arith.constant 5 : index
    %c7_326 = arith.constant 7 : index
    %659 = memref.load %arg6[%c5_325, %c7_326] : memref<8x8xf32, #tpu.memory_space<smem>>
    %660 = vector.broadcast %659 : f32 to vector<8x128xf32>
    %661 = arith.mulf %315, %660 : vector<8x128xf32>
    %662 = arith.addf %658, %661 : vector<8x128xf32>
    %c6_327 = arith.constant 6 : index
    %c7_328 = arith.constant 7 : index
    %663 = memref.load %arg6[%c6_327, %c7_328] : memref<8x8xf32, #tpu.memory_space<smem>>
    %664 = vector.broadcast %663 : f32 to vector<8x128xf32>
    %665 = arith.mulf %351, %664 : vector<8x128xf32>
    %666 = arith.addf %662, %665 : vector<8x128xf32>
    %c7_329 = arith.constant 7 : index
    %c7_330 = arith.constant 7 : index
    %667 = memref.load %arg6[%c7_329, %c7_330] : memref<8x8xf32, #tpu.memory_space<smem>>
    %668 = vector.broadcast %667 : f32 to vector<8x128xf32>
    %669 = arith.mulf %387, %668 : vector<8x128xf32>
    %670 = arith.addf %666, %669 : vector<8x128xf32>
    %c7_331 = arith.constant 7 : index
    %671 = memref.load %arg7[%c7_331] : memref<8xf32, #tpu.memory_space<smem>>
    %672 = vector.broadcast %671 : f32 to vector<8x128xf32>
    %673 = arith.addf %670, %672 : vector<8x128xf32>
    %cst_332 = arith.constant 0.000000e+00 : f32
    %674 = vector.broadcast %cst_332 : f32 to vector<8x128xf32>
    %675 = arith.maximumf %673, %674 : vector<8x128xf32>
    %c0_333 = arith.constant 0 : index
    %c0_334 = arith.constant 0 : index
    %676 = memref.load %arg8[%c0_333, %c0_334] : memref<8x3xf32, #tpu.memory_space<smem>>
    %677 = vector.broadcast %676 : f32 to vector<8x128xf32>
    %678 = arith.mulf %423, %677 : vector<8x128xf32>
    %c1_335 = arith.constant 1 : index
    %c0_336 = arith.constant 0 : index
    %679 = memref.load %arg8[%c1_335, %c0_336] : memref<8x3xf32, #tpu.memory_space<smem>>
    %680 = vector.broadcast %679 : f32 to vector<8x128xf32>
    %681 = arith.mulf %459, %680 : vector<8x128xf32>
    %682 = arith.addf %678, %681 : vector<8x128xf32>
    %c2_337 = arith.constant 2 : index
    %c0_338 = arith.constant 0 : index
    %683 = memref.load %arg8[%c2_337, %c0_338] : memref<8x3xf32, #tpu.memory_space<smem>>
    %684 = vector.broadcast %683 : f32 to vector<8x128xf32>
    %685 = arith.mulf %495, %684 : vector<8x128xf32>
    %686 = arith.addf %682, %685 : vector<8x128xf32>
    %c3_339 = arith.constant 3 : index
    %c0_340 = arith.constant 0 : index
    %687 = memref.load %arg8[%c3_339, %c0_340] : memref<8x3xf32, #tpu.memory_space<smem>>
    %688 = vector.broadcast %687 : f32 to vector<8x128xf32>
    %689 = arith.mulf %531, %688 : vector<8x128xf32>
    %690 = arith.addf %686, %689 : vector<8x128xf32>
    %c4_341 = arith.constant 4 : index
    %c0_342 = arith.constant 0 : index
    %691 = memref.load %arg8[%c4_341, %c0_342] : memref<8x3xf32, #tpu.memory_space<smem>>
    %692 = vector.broadcast %691 : f32 to vector<8x128xf32>
    %693 = arith.mulf %567, %692 : vector<8x128xf32>
    %694 = arith.addf %690, %693 : vector<8x128xf32>
    %c5_343 = arith.constant 5 : index
    %c0_344 = arith.constant 0 : index
    %695 = memref.load %arg8[%c5_343, %c0_344] : memref<8x3xf32, #tpu.memory_space<smem>>
    %696 = vector.broadcast %695 : f32 to vector<8x128xf32>
    %697 = arith.mulf %603, %696 : vector<8x128xf32>
    %698 = arith.addf %694, %697 : vector<8x128xf32>
    %c6_345 = arith.constant 6 : index
    %c0_346 = arith.constant 0 : index
    %699 = memref.load %arg8[%c6_345, %c0_346] : memref<8x3xf32, #tpu.memory_space<smem>>
    %700 = vector.broadcast %699 : f32 to vector<8x128xf32>
    %701 = arith.mulf %639, %700 : vector<8x128xf32>
    %702 = arith.addf %698, %701 : vector<8x128xf32>
    %c7_347 = arith.constant 7 : index
    %c0_348 = arith.constant 0 : index
    %703 = memref.load %arg8[%c7_347, %c0_348] : memref<8x3xf32, #tpu.memory_space<smem>>
    %704 = vector.broadcast %703 : f32 to vector<8x128xf32>
    %705 = arith.mulf %675, %704 : vector<8x128xf32>
    %706 = arith.addf %702, %705 : vector<8x128xf32>
    %c0_349 = arith.constant 0 : index
    %707 = memref.load %arg9[%c0_349] : memref<3xf32, #tpu.memory_space<smem>>
    %708 = vector.broadcast %707 : f32 to vector<8x128xf32>
    %709 = arith.addf %706, %708 : vector<8x128xf32>
    %c0_350 = arith.constant 0 : index
    %c1_351 = arith.constant 1 : index
    %710 = memref.load %arg8[%c0_350, %c1_351] : memref<8x3xf32, #tpu.memory_space<smem>>
    %711 = vector.broadcast %710 : f32 to vector<8x128xf32>
    %712 = arith.mulf %423, %711 : vector<8x128xf32>
    %c1_352 = arith.constant 1 : index
    %c1_353 = arith.constant 1 : index
    %713 = memref.load %arg8[%c1_352, %c1_353] : memref<8x3xf32, #tpu.memory_space<smem>>
    %714 = vector.broadcast %713 : f32 to vector<8x128xf32>
    %715 = arith.mulf %459, %714 : vector<8x128xf32>
    %716 = arith.addf %712, %715 : vector<8x128xf32>
    %c2_354 = arith.constant 2 : index
    %c1_355 = arith.constant 1 : index
    %717 = memref.load %arg8[%c2_354, %c1_355] : memref<8x3xf32, #tpu.memory_space<smem>>
    %718 = vector.broadcast %717 : f32 to vector<8x128xf32>
    %719 = arith.mulf %495, %718 : vector<8x128xf32>
    %720 = arith.addf %716, %719 : vector<8x128xf32>
    %c3_356 = arith.constant 3 : index
    %c1_357 = arith.constant 1 : index
    %721 = memref.load %arg8[%c3_356, %c1_357] : memref<8x3xf32, #tpu.memory_space<smem>>
    %722 = vector.broadcast %721 : f32 to vector<8x128xf32>
    %723 = arith.mulf %531, %722 : vector<8x128xf32>
    %724 = arith.addf %720, %723 : vector<8x128xf32>
    %c4_358 = arith.constant 4 : index
    %c1_359 = arith.constant 1 : index
    %725 = memref.load %arg8[%c4_358, %c1_359] : memref<8x3xf32, #tpu.memory_space<smem>>
    %726 = vector.broadcast %725 : f32 to vector<8x128xf32>
    %727 = arith.mulf %567, %726 : vector<8x128xf32>
    %728 = arith.addf %724, %727 : vector<8x128xf32>
    %c5_360 = arith.constant 5 : index
    %c1_361 = arith.constant 1 : index
    %729 = memref.load %arg8[%c5_360, %c1_361] : memref<8x3xf32, #tpu.memory_space<smem>>
    %730 = vector.broadcast %729 : f32 to vector<8x128xf32>
    %731 = arith.mulf %603, %730 : vector<8x128xf32>
    %732 = arith.addf %728, %731 : vector<8x128xf32>
    %c6_362 = arith.constant 6 : index
    %c1_363 = arith.constant 1 : index
    %733 = memref.load %arg8[%c6_362, %c1_363] : memref<8x3xf32, #tpu.memory_space<smem>>
    %734 = vector.broadcast %733 : f32 to vector<8x128xf32>
    %735 = arith.mulf %639, %734 : vector<8x128xf32>
    %736 = arith.addf %732, %735 : vector<8x128xf32>
    %c7_364 = arith.constant 7 : index
    %c1_365 = arith.constant 1 : index
    %737 = memref.load %arg8[%c7_364, %c1_365] : memref<8x3xf32, #tpu.memory_space<smem>>
    %738 = vector.broadcast %737 : f32 to vector<8x128xf32>
    %739 = arith.mulf %675, %738 : vector<8x128xf32>
    %740 = arith.addf %736, %739 : vector<8x128xf32>
    %c1_366 = arith.constant 1 : index
    %741 = memref.load %arg9[%c1_366] : memref<3xf32, #tpu.memory_space<smem>>
    %742 = vector.broadcast %741 : f32 to vector<8x128xf32>
    %743 = arith.addf %740, %742 : vector<8x128xf32>
    %c0_367 = arith.constant 0 : index
    %c2_368 = arith.constant 2 : index
    %744 = memref.load %arg8[%c0_367, %c2_368] : memref<8x3xf32, #tpu.memory_space<smem>>
    %745 = vector.broadcast %744 : f32 to vector<8x128xf32>
    %746 = arith.mulf %423, %745 : vector<8x128xf32>
    %c1_369 = arith.constant 1 : index
    %c2_370 = arith.constant 2 : index
    %747 = memref.load %arg8[%c1_369, %c2_370] : memref<8x3xf32, #tpu.memory_space<smem>>
    %748 = vector.broadcast %747 : f32 to vector<8x128xf32>
    %749 = arith.mulf %459, %748 : vector<8x128xf32>
    %750 = arith.addf %746, %749 : vector<8x128xf32>
    %c2_371 = arith.constant 2 : index
    %c2_372 = arith.constant 2 : index
    %751 = memref.load %arg8[%c2_371, %c2_372] : memref<8x3xf32, #tpu.memory_space<smem>>
    %752 = vector.broadcast %751 : f32 to vector<8x128xf32>
    %753 = arith.mulf %495, %752 : vector<8x128xf32>
    %754 = arith.addf %750, %753 : vector<8x128xf32>
    %c3_373 = arith.constant 3 : index
    %c2_374 = arith.constant 2 : index
    %755 = memref.load %arg8[%c3_373, %c2_374] : memref<8x3xf32, #tpu.memory_space<smem>>
    %756 = vector.broadcast %755 : f32 to vector<8x128xf32>
    %757 = arith.mulf %531, %756 : vector<8x128xf32>
    %758 = arith.addf %754, %757 : vector<8x128xf32>
    %c4_375 = arith.constant 4 : index
    %c2_376 = arith.constant 2 : index
    %759 = memref.load %arg8[%c4_375, %c2_376] : memref<8x3xf32, #tpu.memory_space<smem>>
    %760 = vector.broadcast %759 : f32 to vector<8x128xf32>
    %761 = arith.mulf %567, %760 : vector<8x128xf32>
    %762 = arith.addf %758, %761 : vector<8x128xf32>
    %c5_377 = arith.constant 5 : index
    %c2_378 = arith.constant 2 : index
    %763 = memref.load %arg8[%c5_377, %c2_378] : memref<8x3xf32, #tpu.memory_space<smem>>
    %764 = vector.broadcast %763 : f32 to vector<8x128xf32>
    %765 = arith.mulf %603, %764 : vector<8x128xf32>
    %766 = arith.addf %762, %765 : vector<8x128xf32>
    %c6_379 = arith.constant 6 : index
    %c2_380 = arith.constant 2 : index
    %767 = memref.load %arg8[%c6_379, %c2_380] : memref<8x3xf32, #tpu.memory_space<smem>>
    %768 = vector.broadcast %767 : f32 to vector<8x128xf32>
    %769 = arith.mulf %639, %768 : vector<8x128xf32>
    %770 = arith.addf %766, %769 : vector<8x128xf32>
    %c7_381 = arith.constant 7 : index
    %c2_382 = arith.constant 2 : index
    %771 = memref.load %arg8[%c7_381, %c2_382] : memref<8x3xf32, #tpu.memory_space<smem>>
    %772 = vector.broadcast %771 : f32 to vector<8x128xf32>
    %773 = arith.mulf %675, %772 : vector<8x128xf32>
    %774 = arith.addf %770, %773 : vector<8x128xf32>
    %c2_383 = arith.constant 2 : index
    %775 = memref.load %arg9[%c2_383] : memref<3xf32, #tpu.memory_space<smem>>
    %776 = vector.broadcast %775 : f32 to vector<8x128xf32>
    %777 = arith.addf %774, %776 : vector<8x128xf32>
    %c0_384 = arith.constant 0 : index
    %c0_385 = arith.constant 0 : index
    %c0_386 = arith.constant 0 : index
    %778 = vector.load %arg10[%c0_384, %c0_385, %c0_386] : memref<3x8x128xf32, #tpu.memory_space<vmem>>, vector<1x8x128xf32>
    %779 = vector.shape_cast %778 : vector<1x8x128xf32> to vector<8x128xf32>
    %780 = vector.shape_cast %709 : vector<8x128xf32> to vector<1x8x128xf32>
    tpu.vector_store %arg10[%c0_384, %c0_385, %c0_386], %780 {strides = array<i32>} : memref<3x8x128xf32, #tpu.memory_space<vmem>>, vector<1x8x128xf32>,
    %c1_387 = arith.constant 1 : index
    %c0_388 = arith.constant 0 : index
    %c0_389 = arith.constant 0 : index
    %781 = vector.load %arg10[%c1_387, %c0_388, %c0_389] : memref<3x8x128xf32, #tpu.memory_space<vmem>>, vector<1x8x128xf32>
    %782 = vector.shape_cast %781 : vector<1x8x128xf32> to vector<8x128xf32>
    %783 = vector.shape_cast %743 : vector<8x128xf32> to vector<1x8x128xf32>
    tpu.vector_store %arg10[%c1_387, %c0_388, %c0_389], %783 {strides = array<i32>} : memref<3x8x128xf32, #tpu.memory_space<vmem>>, vector<1x8x128xf32>,
    %c2_390 = arith.constant 2 : index
    %c0_391 = arith.constant 0 : index
    %c0_392 = arith.constant 0 : index
    %784 = vector.load %arg10[%c2_390, %c0_391, %c0_392] : memref<3x8x128xf32, #tpu.memory_space<vmem>>, vector<1x8x128xf32>
    %785 = vector.shape_cast %784 : vector<1x8x128xf32> to vector<8x128xf32>
    %786 = vector.shape_cast %777 : vector<8x128xf32> to vector<1x8x128xf32>
    tpu.vector_store %arg10[%c2_390, %c0_391, %c0_392], %786 {strides = array<i32>} : memref<3x8x128xf32, #tpu.memory_space<vmem>>, vector<1x8x128xf32>,
    return
  }
  func.func @transform_0(%arg0: i32) -> (i32, i32, i32) {
    %c0_i32 = arith.constant 0 : i32
    %c0_i32_0 = arith.constant 0 : i32
    %c0_i32_1 = arith.constant 0 : i32
    return %c0_i32, %arg0, %c0_i32_0 : i32, i32, i32
  }
  func.func @transform_1(%arg0: i32) -> (i32, i32) {
    %c0_i32 = arith.constant 0 : i32
    %c0_i32_0 = arith.constant 0 : i32
    %c0_i32_1 = arith.constant 0 : i32
    return %c0_i32, %c0_i32_0 : i32, i32
  }
  func.func @transform_2(%arg0: i32) -> i32 {
    %c0_i32 = arith.constant 0 : i32
    %c0_i32_0 = arith.constant 0 : i32
    return %c0_i32 : i32
  }
  func.func @transform_3(%arg0: i32) -> (i32, i32) {
    %c0_i32 = arith.constant 0 : i32
    %c0_i32_0 = arith.constant 0 : i32
    %c0_i32_1 = arith.constant 0 : i32
    return %c0_i32, %c0_i32_0 : i32, i32
  }
  func.func @transform_4(%arg0: i32) -> i32 {
    %c0_i32 = arith.constant 0 : i32
    %c0_i32_0 = arith.constant 0 : i32
    return %c0_i32 : i32
  }
  func.func @transform_5(%arg0: i32) -> (i32, i32) {
    %c0_i32 = arith.constant 0 : i32
    %c0_i32_0 = arith.constant 0 : i32
    %c0_i32_1 = arith.constant 0 : i32
    return %c0_i32, %c0_i32_0 : i32, i32
  }
  func.func @transform_6(%arg0: i32) -> i32 {
    %c0_i32 = arith.constant 0 : i32
    %c0_i32_0 = arith.constant 0 : i32
    return %c0_i32 : i32
  }
  func.func @transform_7(%arg0: i32) -> (i32, i32) {
    %c0_i32 = arith.constant 0 : i32
    %c0_i32_0 = arith.constant 0 : i32
    %c0_i32_1 = arith.constant 0 : i32
    return %c0_i32, %c0_i32_0 : i32, i32
  }
  func.func @transform_8(%arg0: i32) -> i32 {
    %c0_i32 = arith.constant 0 : i32
    %c0_i32_0 = arith.constant 0 : i32
    return %c0_i32 : i32
  }
  func.func @transform_9(%arg0: i32) -> (i32, i32, i32) {
    %c0_i32 = arith.constant 0 : i32
    %c0_i32_0 = arith.constant 0 : i32
    %c0_i32_1 = arith.constant 0 : i32
    return %c0_i32, %arg0, %c0_i32_0 : i32, i32, i32
  }
}

</mosaic_0001>

<llo_original>
// kernel: mlp_forward.1
$region0: #{mlp_forward.1}
  #allocation0 [shape = 'u32[]', space=smem, size = 0x4, offset = 0x4, fixed_abs, tag = 'smem constant byte address 0x4 - core index']
  #allocation1 [shape = 'u32[144,128]{1,0:T(1,128)}', space=vmem, size = 0x12000, scoped, tag = 'internal scratch']
  %s0 = inlined_call_operand.vmem [shape: f32[2,8,128], index: 0, kind: input, shape index: {}]
  %s1 = inlined_call_operand.vmem [shape: f32[2,8], index: 1, kind: input, shape index: {}]
  %s2 = inlined_call_operand.vmem [shape: f32[8], index: 2, kind: input, shape index: {}]
  %s3 = inlined_call_operand.vmem [shape: f32[8,8], index: 3, kind: input, shape index: {}]
  %s4 = inlined_call_operand.vmem [shape: f32[8], index: 4, kind: input, shape index: {}]
  %s5 = inlined_call_operand.vmem [shape: f32[8,8], index: 5, kind: input, shape index: {}]
  %s6 = inlined_call_operand.vmem [shape: f32[8], index: 6, kind: input, shape index: {}]
  %s7 = inlined_call_operand.vmem [shape: f32[8,3], index: 7, kind: input, shape index: {}]
  %s8 = inlined_call_operand.vmem [shape: f32[3], index: 8, kind: input, shape index: {}]
  %s9 = inlined_call_operand.vmem [shape: f32[3,8,128], index: 9, kind: output, shape index: {}]
  %s10 = sld [smem:[#allocation0]]
  $region78: #{mlp_forward.1} parent=0
    _
  %s12 = ssub.s32 1, %s10
  %s13 = scalar_select 0, %s12, %s10
  $region1: #{mlp_forward.1} parent=0
    #allocation2 [shape = 'u8[1024]{0}', space=smem, size = 0x400, scoped, tag = 'input window, operand 1, single buffered']
    #allocation3 [shape = 's32[1]{0}', space=sflag, size = 0x4, scoped, tag = 'scoped memory for mlp_forward.1']
    #allocation4 [shape = 'u8[512]{0}', space=smem, size = 0x200, scoped, tag = 'input window, operand 2, single buffered']
    #allocation5 [shape = 's32[1]{0}', space=sflag, size = 0x4, scoped, tag = 'scoped memory for mlp_forward.1']
    #allocation6 [shape = 'u8[4096]{0}', space=smem, size = 0x1000, scoped, tag = 'input window, operand 3, single buffered']
    #allocation7 [shape = 'u8[512]{0}', space=smem, size = 0x200, scoped, tag = 'input window, operand 4, single buffered']
    #allocation8 [shape = 's32[1]{0}', space=sflag, size = 0x4, scoped, tag = 'scoped memory for mlp_forward.1']
    #allocation9 [shape = 'u8[4096]{0}', space=smem, size = 0x1000, scoped, tag = 'input window, operand 5, single buffered']
    #allocation10 [shape = 'u8[512]{0}', space=smem, size = 0x200, scoped, tag = 'input window, operand 6, single buffered']
    #allocation11 [shape = 's32[1]{0}', space=sflag, size = 0x4, scoped, tag = 'scoped memory for mlp_forward.1']
    #allocation12 [shape = 'u8[4096]{0}', space=smem, size = 0x1000, scoped, tag = 'input window, operand 7, single buffered']
    #allocation13 [shape = 'u8[512]{0}', space=smem, size = 0x200, scoped, tag = 'input window, operand 8, single buffered']
    #allocation14 [shape = 's32[1]{0}', space=sflag, size = 0x4, scoped, tag = 'scoped memory for mlp_forward.1']
    %14 = vsyncpa [#allocation3], 0
    %15 = vsyncpa [#allocation5], 0
    %16 = vsyncpa [#allocation8], 0
    %17 = vsyncpa [#allocation11], 0
    %18 = vsyncpa [#allocation14], 0
    // Predicated region
    $region2: #{mlp_forward.1} parent=1 // pred_check
      _
    $region3: #{mlp_forward.1} parent=1 // pred_check_branch
      %20 = sbr.rel (0) target = $region5
    $region4: #{mlp_forward.1} parent=1 // pred_region
      _
    $region5: #{mlp_forward.1} parent=1 // pred_fallthru
      _
    // Predicated region
    $region6: #{mlp_forward.1} parent=1 // pred_check
      _
    $region7: #{mlp_forward.1} parent=1 // pred_check_branch
      %22 = sbr.rel (0) target = $region9
    $region8: #{mlp_forward.1} parent=1 // pred_region
      %s24 = ssub.s32 32, 32
      %25 = vsyncadd [#allocation3], %s24
      %s27 = sshll.u32 %s1, 4
      %s28 = int_to_ptr.vmem [resolvable:$true] %s27
      %30 = dma.vmem_to_smem %s28, 32, [#allocation2], [#allocation3]
    $region9: #{mlp_forward.1} parent=1 // pred_fallthru
      _
    // Predicated region
    $region10: #{mlp_forward.1} parent=1 // pred_check
      _
    $region11: #{mlp_forward.1} parent=1 // pred_check_branch
      %32 = sbr.rel (0) target = $region13
    $region12: #{mlp_forward.1} parent=1 // pred_region
      %s34 = ssub.s32 16, 16
      %35 = vsyncadd [#allocation5], %s34
      %s37 = sshll.u32 %s2, 4
      %s38 = int_to_ptr.vmem [resolvable:$true] %s37
      %40 = dma.vmem_to_smem %s38, 16, [#allocation4], [#allocation5]
    $region13: #{mlp_forward.1} parent=1 // pred_fallthru
      _
    // Predicated region
    $region14: #{mlp_forward.1} parent=1 // pred_check
      _
    $region15: #{mlp_forward.1} parent=1 // pred_check_branch
      %42 = sbr.rel (0) target = $region17
    $region16: #{mlp_forward.1} parent=1 // pred_region
      %s44 = ssub.s32 128, 128
      %45 = vsyncadd [#allocation5], %s44
      %s47 = sshll.u32 %s3, 4
      %s48 = int_to_ptr.vmem [resolvable:$true] %s47
      %50 = dma.vmem_to_smem %s48, 128, [#allocation6], [#allocation5]
    $region17: #{mlp_forward.1} parent=1 // pred_fallthru
      _
    // Predicated region
    $region18: #{mlp_forward.1} parent=1 // pred_check
      _
    $region19: #{mlp_forward.1} parent=1 // pred_check_branch
      %52 = sbr.rel (0) target = $region21
    $region20: #{mlp_forward.1} parent=1 // pred_region
      %s54 = ssub.s32 16, 16
      %55 = vsyncadd [#allocation8], %s54
      %s57 = sshll.u32 %s4, 4
      %s58 = int_to_ptr.vmem [resolvable:$true] %s57
      %60 = dma.vmem_to_smem %s58, 16, [#allocation7], [#allocation8]
    $region21: #{mlp_forward.1} parent=1 // pred_fallthru
      _
    // Predicated region
    $region22: #{mlp_forward.1} parent=1 // pred_check
      _
    $region23: #{mlp_forward.1} parent=1 // pred_check_branch
      %62 = sbr.rel (0) target = $region25
    $region24: #{mlp_forward.1} parent=1 // pred_region
      %s64 = ssub.s32 128, 128
      %65 = vsyncadd [#allocation8], %s64
      %s67 = sshll.u32 %s5, 4
      %s68 = int_to_ptr.vmem [resolvable:$true] %s67
      %70 = dma.vmem_to_smem %s68, 128, [#allocation9], [#allocation8]
    $region25: #{mlp_forward.1} parent=1 // pred_fallthru
      _
    // Predicated region
    $region26: #{mlp_forward.1} parent=1 // pred_check
      _
    $region27: #{mlp_forward.1} parent=1 // pred_check_branch
      %72 = sbr.rel (0) target = $region29
    $region28: #{mlp_forward.1} parent=1 // pred_region
      %s74 = ssub.s32 16, 16
      %75 = vsyncadd [#allocation11], %s74
      %s77 = sshll.u32 %s6, 4
      %s78 = int_to_ptr.vmem [resolvable:$true] %s77
      %80 = dma.vmem_to_smem %s78, 16, [#allocation10], [#allocation11]
    $region29: #{mlp_forward.1} parent=1 // pred_fallthru
      _
    // Predicated region
    $region30: #{mlp_forward.1} parent=1 // pred_check
      _
    $region31: #{mlp_forward.1} parent=1 // pred_check_branch
      %82 = sbr.rel (0) target = $region33
    $region32: #{mlp_forward.1} parent=1 // pred_region
      %s84 = ssub.s32 128, 128
      %85 = vsyncadd [#allocation11], %s84
      %s87 = sshll.u32 %s7, 4
      %s88 = int_to_ptr.vmem [resolvable:$true] %s87
      %90 = dma.vmem_to_smem %s88, 128, [#allocation12], [#allocation11]
    $region33: #{mlp_forward.1} parent=1 // pred_fallthru
      _
    // Predicated region
    $region34: #{mlp_forward.1} parent=1 // pred_check
      _
    $region35: #{mlp_forward.1} parent=1 // pred_check_branch
      %92 = sbr.rel (0) target = $region37
    $region36: #{mlp_forward.1} parent=1 // pred_region
      %s94 = ssub.s32 16, 16
      %95 = vsyncadd [#allocation14], %s94
      %s97 = sshll.u32 %s8, 4
      %s98 = int_to_ptr.vmem [resolvable:$true] %s97
      %100 = dma.vmem_to_smem %s98, 16, [#allocation13], [#allocation14]
    $region37: #{mlp_forward.1} parent=1 // pred_fallthru
      _
    // Predicated region
    $region38: #{mlp_forward.1} parent=1 // pred_check
      _
    $region39: #{mlp_forward.1} parent=1 // pred_check_branch
      %102 = sbr.rel (0) target = $region41
    $region40: #{mlp_forward.1} parent=1 // pred_region
      %103 = dma.done [#allocation3], 32
    $region41: #{mlp_forward.1} parent=1 // pred_fallthru
      _
    // Predicated region
    $region42: #{mlp_forward.1} parent=1 // pred_check
      _
    $region43: #{mlp_forward.1} parent=1 // pred_check_branch
      %105 = sbr.rel (0) target = $region45
    $region44: #{mlp_forward.1} parent=1 // pred_region
      %106 = dma.done [#allocation5], 16
    $region45: #{mlp_forward.1} parent=1 // pred_fallthru
      _
    // Predicated region
    $region46: #{mlp_forward.1} parent=1 // pred_check
      _
    $region47: #{mlp_forward.1} parent=1 // pred_check_branch
      %108 = sbr.rel (0) target = $region49
    $region48: #{mlp_forward.1} parent=1 // pred_region
      %109 = dma.done [#allocation5], 128
    $region49: #{mlp_forward.1} parent=1 // pred_fallthru
      _
    // Predicated region
    $region50: #{mlp_forward.1} parent=1 // pred_check
      _
    $region51: #{mlp_forward.1} parent=1 // pred_check_branch
      %111 = sbr.rel (0) target = $region53
    $region52: #{mlp_forward.1} parent=1 // pred_region
      %112 = dma.done [#allocation8], 16
    $region53: #{mlp_forward.1} parent=1 // pred_fallthru
      _
    // Predicated region
    $region54: #{mlp_forward.1} parent=1 // pred_check
      _
    $region55: #{mlp_forward.1} parent=1 // pred_check_branch
      %114 = sbr.rel (0) target = $region57
    $region56: #{mlp_forward.1} parent=1 // pred_region
      %115 = dma.done [#allocation8], 128
    $region57: #{mlp_forward.1} parent=1 // pred_fallthru
      _
    // Predicated region
    $region58: #{mlp_forward.1} parent=1 // pred_check
      _
    $region59: #{mlp_forward.1} parent=1 // pred_check_branch
      %117 = sbr.rel (0) target = $region61
    $region60: #{mlp_forward.1} parent=1 // pred_region
      %118 = dma.done [#allocation11], 16
    $region61: #{mlp_forward.1} parent=1 // pred_fallthru
      _
    // Predicated region
    $region62: #{mlp_forward.1} parent=1 // pred_check
      _
    $region63: #{mlp_forward.1} parent=1 // pred_check_branch
      %120 = sbr.rel (0) target = $region65
    $region64: #{mlp_forward.1} parent=1 // pred_region
      %121 = dma.done [#allocation11], 128
    $region65: #{mlp_forward.1} parent=1 // pred_fallthru
      _
    // Predicated region
    $region66: #{mlp_forward.1} parent=1 // pred_check
      _
    $region67: #{mlp_forward.1} parent=1 // pred_check_branch
      %123 = sbr.rel (0) target = $region69
    $region68: #{mlp_forward.1} parent=1 // pred_region
      %124 = dma.done [#allocation14], 16
    $region69: #{mlp_forward.1} parent=1 // pred_fallthru
      _
    %125 = sfence
    %v126 = vld [vmem:[%s0] sm:$0xff]
    %s127 = scalar_lea.vmem %s0, 8
    %v128 = vld [vmem:[%s127] sm:$0xff]
    %s129 = sld [smem:[#allocation2]]
    %v130 = vstv %s129
    %v131 = vmul.f32 %v126, %v130
    %s132 = sld [smem:[#allocation2 + $0x80]]
    %v133 = vstv %s132
    %v134 = vmul.f32 %v128, %v133
    %v135 = vadd.f32 %v131, %v134
    %s136 = sld [smem:[#allocation4]]
    %v137 = vstv %s136
    %v138 = vadd.f32 %v135, %v137
    %v139 = vmax.f32 %v138, 0.0
    %s140 = sld [smem:[#allocation2 + $0x1]]
    %v141 = vstv %s140
    %v142 = vmul.f32 %v126, %v141
    %s143 = sld [smem:[#allocation2 + $0x81]]
    %v144 = vstv %s143
    %v145 = vmul.f32 %v128, %v144
    %v146 = vadd.f32 %v142, %v145
    %s147 = sld [smem:[#allocation4 + $0x1]]
    %v148 = vstv %s147
    %v149 = vadd.f32 %v146, %v148
    %v150 = vmax.f32 %v149, 0.0
    %s151 = sld [smem:[#allocation2 + $0x2]]
    %v152 = vstv %s151
    %v153 = vmul.f32 %v126, %v152
    %s154 = sld [smem:[#allocation2 + $0x82]]
    %v155 = vstv %s154
    %v156 = vmul.f32 %v128, %v155
    %v157 = vadd.f32 %v153, %v156
    %s158 = sld [smem:[#allocation4 + $0x2]]
    %v159 = vstv %s158
    %v160 = vadd.f32 %v157, %v159
    %v161 = vmax.f32 %v160, 0.0
    %s162 = sld [smem:[#allocation2 + $0x3]]
    %v163 = vstv %s162
    %v164 = vmul.f32 %v126, %v163
    %s165 = sld [smem:[#allocation2 + $0x83]]
    %v166 = vstv %s165
    %v167 = vmul.f32 %v128, %v166
    %v168 = vadd.f32 %v164, %v167
    %s169 = sld [smem:[#allocation4 + $0x3]]
    %v170 = vstv %s169
    %v171 = vadd.f32 %v168, %v170
    %v172 = vmax.f32 %v171, 0.0
    %s173 = sld [smem:[#allocation2 + $0x4]]
    %v174 = vstv %s173
    %v175 = vmul.f32 %v126, %v174
    %s176 = sld [smem:[#allocation2 + $0x84]]
    %v177 = vstv %s176
    %v178 = vmul.f32 %v128, %v177
    %v179 = vadd.f32 %v175, %v178
    %s180 = sld [smem:[#allocation4 + $0x4]]
    %v181 = vstv %s180
    %v182 = vadd.f32 %v179, %v181
    %v183 = vmax.f32 %v182, 0.0
    %s184 = sld [smem:[#allocation2 + $0x5]]
    %v185 = vstv %s184
    %v186 = vmul.f32 %v126, %v185
    %s187 = sld [smem:[#allocation2 + $0x85]]
    %v188 = vstv %s187
    %v189 = vmul.f32 %v128, %v188
    %v190 = vadd.f32 %v186, %v189
    %s191 = sld [smem:[#allocation4 + $0x5]]
    %v192 = vstv %s191
    %v193 = vadd.f32 %v190, %v192
    %v194 = vmax.f32 %v193, 0.0
    %s195 = sld [smem:[#allocation2 + $0x6]]
    %v196 = vstv %s195
    %v197 = vmul.f32 %v126, %v196
    %s198 = sld [smem:[#allocation2 + $0x86]]
    %v199 = vstv %s198
    %v200 = vmul.f32 %v128, %v199
    %v201 = vadd.f32 %v197, %v200
    %s202 = sld [smem:[#allocation4 + $0x6]]
    %v203 = vstv %s202
    %v204 = vadd.f32 %v201, %v203
    %v205 = vmax.f32 %v204, 0.0
    %s206 = sld [smem:[#allocation2 + $0x7]]
    %v207 = vstv %s206
    %v208 = vmul.f32 %v126, %v207
    %s209 = sld [smem:[#allocation2 + $0x87]]
    %v210 = vstv %s209
    %v211 = vmul.f32 %v128, %v210
    %v212 = vadd.f32 %v208, %v211
    %s213 = sld [smem:[#allocation4 + $0x7]]
    %v214 = vstv %s213
    %v215 = vadd.f32 %v212, %v214
    %v216 = vmax.f32 %v215, 0.0
    %s217 = sld [smem:[#allocation6]]
    %v218 = vstv %s217
    %v219 = vmul.f32 %v139, %v218
    %s220 = sld [smem:[#allocation6 + $0x80]]
    %v221 = vstv %s220
    %v222 = vmul.f32 %v150, %v221
    %v223 = vadd.f32 %v219, %v222
    %s224 = sld [smem:[#allocation6 + $0x100]]
    %v225 = vstv %s224
    %v226 = vmul.f32 %v161, %v225
    %v227 = vadd.f32 %v223, %v226
    %s228 = sld [smem:[#allocation6 + $0x180]]
    %v229 = vstv %s228
    %v230 = vmul.f32 %v172, %v229
    %v231 = vadd.f32 %v227, %v230
    %s232 = sld [smem:[#allocation6 + $0x200]]
    %v233 = vstv %s232
    %v234 = vmul.f32 %v183, %v233
    %v235 = vadd.f32 %v231, %v234
    %s236 = sld [smem:[#allocation6 + $0x280]]
    %v237 = vstv %s236
    %v238 = vmul.f32 %v194, %v237
    %v239 = vadd.f32 %v235, %v238
    %s240 = sld [smem:[#allocation6 + $0x300]]
    %v241 = vstv %s240
    %v242 = vmul.f32 %v205, %v241
    %v243 = vadd.f32 %v239, %v242
    %s244 = sld [smem:[#allocation6 + $0x380]]
    %v245 = vstv %s244
    %v246 = vmul.f32 %v216, %v245
    %v247 = vadd.f32 %v243, %v246
    %s248 = sld [smem:[#allocation7]]
    %v249 = vstv %s248
    %v250 = vadd.f32 %v247, %v249
    %v251 = vmax.f32 %v250, 0.0
    %s252 = sld [smem:[#allocation6 + $0x1]]
    %v253 = vstv %s252
    %v254 = vmul.f32 %v139, %v253
    %s255 = sld [smem:[#allocation6 + $0x81]]
    %v256 = vstv %s255
    %v257 = vmul.f32 %v150, %v256
    %v258 = vadd.f32 %v254, %v257
    %s259 = sld [smem:[#allocation6 + $0x101]]
    %v260 = vstv %s259
    %v261 = vmul.f32 %v161, %v260
    %v262 = vadd.f32 %v258, %v261
    %s263 = sld [smem:[#allocation6 + $0x181]]
    %v264 = vstv %s263
    %v265 = vmul.f32 %v172, %v264
    %v266 = vadd.f32 %v262, %v265
    %s267 = sld [smem:[#allocation6 + $0x201]]
    %v268 = vstv %s267
    %v269 = vmul.f32 %v183, %v268
    %v270 = vadd.f32 %v266, %v269
    %s271 = sld [smem:[#allocation6 + $0x281]]
    %v272 = vstv %s271
    %v273 = vmul.f32 %v194, %v272
    %v274 = vadd.f32 %v270, %v273
    %s275 = sld [smem:[#allocation6 + $0x301]]
    %v276 = vstv %s275
    %v277 = vmul.f32 %v205, %v276
    %v278 = vadd.f32 %v274, %v277
    %s279 = sld [smem:[#allocation6 + $0x381]]
    %v280 = vstv %s279
    %v281 = vmul.f32 %v216, %v280
    %v282 = vadd.f32 %v278, %v281
    %s283 = sld [smem:[#allocation7 + $0x1]]
    %v284 = vstv %s283
    %v285 = vadd.f32 %v282, %v284
    %v286 = vmax.f32 %v285, 0.0
    %s287 = sld [smem:[#allocation6 + $0x2]]
    %v288 = vstv %s287
    %v289 = vmul.f32 %v139, %v288
    %s290 = sld [smem:[#allocation6 + $0x82]]
    %v291 = vstv %s290
    %v292 = vmul.f32 %v150, %v291
    %v293 = vadd.f32 %v289, %v292
    %s294 = sld [smem:[#allocation6 + $0x102]]
    %v295 = vstv %s294
    %v296 = vmul.f32 %v161, %v295
    %v297 = vadd.f32 %v293, %v296
    %s298 = sld [smem:[#allocation6 + $0x182]]
    %v299 = vstv %s298
    %v300 = vmul.f32 %v172, %v299
    %v301 = vadd.f32 %v297, %v300
    %s302 = sld [smem:[#allocation6 + $0x202]]
    %v303 = vstv %s302
    %v304 = vmul.f32 %v183, %v303
    %v305 = vadd.f32 %v301, %v304
    %s306 = sld [smem:[#allocation6 + $0x282]]
    %v307 = vstv %s306
    %v308 = vmul.f32 %v194, %v307
    %v309 = vadd.f32 %v305, %v308
    %s310 = sld [smem:[#allocation6 + $0x302]]
    %v311 = vstv %s310
    %v312 = vmul.f32 %v205, %v311
    %v313 = vadd.f32 %v309, %v312
    %s314 = sld [smem:[#allocation6 + $0x382]]
    %v315 = vstv %s314
    %v316 = vmul.f32 %v216, %v315
    %v317 = vadd.f32 %v313, %v316
    %s318 = sld [smem:[#allocation7 + $0x2]]
    %v319 = vstv %s318
    %v320 = vadd.f32 %v317, %v319
    %v321 = vmax.f32 %v320, 0.0
    %s322 = sld [smem:[#allocation6 + $0x3]]
    %v323 = vstv %s322
    %v324 = vmul.f32 %v139, %v323
    %s325 = sld [smem:[#allocation6 + $0x83]]
    %v326 = vstv %s325
    %v327 = vmul.f32 %v150, %v326
    %v328 = vadd.f32 %v324, %v327
    %s329 = sld [smem:[#allocation6 + $0x103]]
    %v330 = vstv %s329
    %v331 = vmul.f32 %v161, %v330
    %v332 = vadd.f32 %v328, %v331
    %s333 = sld [smem:[#allocation6 + $0x183]]
    %v334 = vstv %s333
    %v335 = vmul.f32 %v172, %v334
    %v336 = vadd.f32 %v332, %v335
    %s337 = sld [smem:[#allocation6 + $0x203]]
    %v338 = vstv %s337
    %v339 = vmul.f32 %v183, %v338
    %v340 = vadd.f32 %v336, %v339
    %s341 = sld [smem:[#allocation6 + $0x283]]
    %v342 = vstv %s341
    %v343 = vmul.f32 %v194, %v342
    %v344 = vadd.f32 %v340, %v343
    %s345 = sld [smem:[#allocation6 + $0x303]]
    %v346 = vstv %s345
    %v347 = vmul.f32 %v205, %v346
    %v348 = vadd.f32 %v344, %v347
    %s349 = sld [smem:[#allocation6 + $0x383]]
    %v350 = vstv %s349
    %v351 = vmul.f32 %v216, %v350
    %v352 = vadd.f32 %v348, %v351
    %s353 = sld [smem:[#allocation7 + $0x3]]
    %v354 = vstv %s353
    %v355 = vadd.f32 %v352, %v354
    %v356 = vmax.f32 %v355, 0.0
    %s357 = sld [smem:[#allocation6 + $0x4]]
    %v358 = vstv %s357
    %v359 = vmul.f32 %v139, %v358
    %s360 = sld [smem:[#allocation6 + $0x84]]
    %v361 = vstv %s360
    %v362 = vmul.f32 %v150, %v361
    %v363 = vadd.f32 %v359, %v362
    %s364 = sld [smem:[#allocation6 + $0x104]]
    %v365 = vstv %s364
    %v366 = vmul.f32 %v161, %v365
    %v367 = vadd.f32 %v363, %v366
    %s368 = sld [smem:[#allocation6 + $0x184]]
    %v369 = vstv %s368
    %v370 = vmul.f32 %v172, %v369
    %v371 = vadd.f32 %v367, %v370
    %s372 = sld [smem:[#allocation6 + $0x204]]
    %v373 = vstv %s372
    %v374 = vmul.f32 %v183, %v373
    %v375 = vadd.f32 %v371, %v374
    %s376 = sld [smem:[#allocation6 + $0x284]]
    %v377 = vstv %s376
    %v378 = vmul.f32 %v194, %v377
    %v379 = vadd.f32 %v375, %v378
    %s380 = sld [smem:[#allocation6 + $0x304]]
    %v381 = vstv %s380
    %v382 = vmul.f32 %v205, %v381
    %v383 = vadd.f32 %v379, %v382
    %s384 = sld [smem:[#allocation6 + $0x384]]
    %v385 = vstv %s384
    %v386 = vmul.f32 %v216, %v385
    %v387 = vadd.f32 %v383, %v386
    %s388 = sld [smem:[#allocation7 + $0x4]]
    %v389 = vstv %s388
    %v390 = vadd.f32 %v387, %v389
    %v391 = vmax.f32 %v390, 0.0
    %s392 = sld [smem:[#allocation6 + $0x5]]
    %v393 = vstv %s392
    %v394 = vmul.f32 %v139, %v393
    %s395 = sld [smem:[#allocation6 + $0x85]]
    %v396 = vstv %s395
    %v397 = vmul.f32 %v150, %v396
    %v398 = vadd.f32 %v394, %v397
    %s399 = sld [smem:[#allocation6 + $0x105]]
    %v400 = vstv %s399
    %v401 = vmul.f32 %v161, %v400
    %v402 = vadd.f32 %v398, %v401
    %s403 = sld [smem:[#allocation6 + $0x185]]
    %v404 = vstv %s403
    %v405 = vmul.f32 %v172, %v404
    %v406 = vadd.f32 %v402, %v405
    %s407 = sld [smem:[#allocation6 + $0x205]]
    %v408 = vstv %s407
    %v409 = vmul.f32 %v183, %v408
    %v410 = vadd.f32 %v406, %v409
    %s411 = sld [smem:[#allocation6 + $0x285]]
    %v412 = vstv %s411
    %v413 = vmul.f32 %v194, %v412
    %v414 = vadd.f32 %v410, %v413
    %s415 = sld [smem:[#allocation6 + $0x305]]
    %v416 = vstv %s415
    %v417 = vmul.f32 %v205, %v416
    %v418 = vadd.f32 %v414, %v417
    %s419 = sld [smem:[#allocation6 + $0x385]]
    %v420 = vstv %s419
    %v421 = vmul.f32 %v216, %v420
    %v422 = vadd.f32 %v418, %v421
    %s423 = sld [smem:[#allocation7 + $0x5]]
    %v424 = vstv %s423
    %v425 = vadd.f32 %v422, %v424
    %v426 = vmax.f32 %v425, 0.0
    %s427 = sld [smem:[#allocation6 + $0x6]]
    %v428 = vstv %s427
    %v429 = vmul.f32 %v139, %v428
    %s430 = sld [smem:[#allocation6 + $0x86]]
    %v431 = vstv %s430
    %v432 = vmul.f32 %v150, %v431
    %v433 = vadd.f32 %v429, %v432
    %s434 = sld [smem:[#allocation6 + $0x106]]
    %v435 = vstv %s434
    %v436 = vmul.f32 %v161, %v435
    %v437 = vadd.f32 %v433, %v436
    %s438 = sld [smem:[#allocation6 + $0x186]]
    %v439 = vstv %s438
    %v440 = vmul.f32 %v172, %v439
    %v441 = vadd.f32 %v437, %v440
    %s442 = sld [smem:[#allocation6 + $0x206]]
    %v443 = vstv %s442
    %v444 = vmul.f32 %v183, %v443
    %v445 = vadd.f32 %v441, %v444
    %s446 = sld [smem:[#allocation6 + $0x286]]
    %v447 = vstv %s446
    %v448 = vmul.f32 %v194, %v447
    %v449 = vadd.f32 %v445, %v448
    %s450 = sld [smem:[#allocation6 + $0x306]]
    %v451 = vstv %s450
    %v452 = vmul.f32 %v205, %v451
    %v453 = vadd.f32 %v449, %v452
    %s454 = sld [smem:[#allocation6 + $0x386]]
    %v455 = vstv %s454
    %v456 = vmul.f32 %v216, %v455
    %v457 = vadd.f32 %v453, %v456
    %s458 = sld [smem:[#allocation7 + $0x6]]
    %v459 = vstv %s458
    %v460 = vadd.f32 %v457, %v459
    %v461 = vmax.f32 %v460, 0.0
    %s462 = sld [smem:[#allocation6 + $0x7]]
    %v463 = vstv %s462
    %v464 = vmul.f32 %v139, %v463
    %s465 = sld [smem:[#allocation6 + $0x87]]
    %v466 = vstv %s465
    %v467 = vmul.f32 %v150, %v466
    %v468 = vadd.f32 %v464, %v467
    %s469 = sld [smem:[#allocation6 + $0x107]]
    %v470 = vstv %s469
    %v471 = vmul.f32 %v161, %v470
    %v472 = vadd.f32 %v468, %v471
    %s473 = sld [smem:[#allocation6 + $0x187]]
    %v474 = vstv %s473
    %v475 = vmul.f32 %v172, %v474
    %v476 = vadd.f32 %v472, %v475
    %s477 = sld [smem:[#allocation6 + $0x207]]
    %v478 = vstv %s477
    %v479 = vmul.f32 %v183, %v478
    %v480 = vadd.f32 %v476, %v479
    %s481 = sld [smem:[#allocation6 + $0x287]]
    %v482 = vstv %s481
    %v483 = vmul.f32 %v194, %v482
    %v484 = vadd.f32 %v480, %v483
    %s485 = sld [smem:[#allocation6 + $0x307]]
    %v486 = vstv %s485
    %v487 = vmul.f32 %v205, %v486
    %v488 = vadd.f32 %v484, %v487
    %s489 = sld [smem:[#allocation6 + $0x387]]
    %v490 = vstv %s489
    %v491 = vmul.f32 %v216, %v490
    %v492 = vadd.f32 %v488, %v491
    %s493 = sld [smem:[#allocation7 + $0x7]]
    %v494 = vstv %s493
    %v495 = vadd.f32 %v492, %v494
    %v496 = vmax.f32 %v495, 0.0
    %s497 = sld [smem:[#allocation9]]
    %v498 = vstv %s497
    %v499 = vmul.f32 %v251, %v498
    %s500 = sld [smem:[#allocation9 + $0x80]]
    %v501 = vstv %s500
    %v502 = vmul.f32 %v286, %v501
    %v503 = vadd.f32 %v499, %v502
    %s504 = sld [smem:[#allocation9 + $0x100]]
    %v505 = vstv %s504
    %v506 = vmul.f32 %v321, %v505
    %v507 = vadd.f32 %v503, %v506
    %s508 = sld [smem:[#allocation9 + $0x180]]
    %v509 = vstv %s508
    %v510 = vmul.f32 %v356, %v509
    %v511 = vadd.f32 %v507, %v510
    %s512 = sld [smem:[#allocation9 + $0x200]]
    %v513 = vstv %s512
    %v514 = vmul.f32 %v391, %v513
    %v515 = vadd.f32 %v511, %v514
    %s516 = sld [smem:[#allocation9 + $0x280]]
    %v517 = vstv %s516
    %v518 = vmul.f32 %v426, %v517
    %v519 = vadd.f32 %v515, %v518
    %s520 = sld [smem:[#allocation9 + $0x300]]
    %v521 = vstv %s520
    %v522 = vmul.f32 %v461, %v521
    %v523 = vadd.f32 %v519, %v522
    %s524 = sld [smem:[#allocation9 + $0x380]]
    %v525 = vstv %s524
    %v526 = vmul.f32 %v496, %v525
    %v527 = vadd.f32 %v523, %v526
    %s528 = sld [smem:[#allocation10]]
    %v529 = vstv %s528
    %v530 = vadd.f32 %v527, %v529
    %v531 = vmax.f32 %v530, 0.0
    %s532 = sld [smem:[#allocation9 + $0x1]]
    %v533 = vstv %s532
    %v534 = vmul.f32 %v251, %v533
    %s535 = sld [smem:[#allocation9 + $0x81]]
    %v536 = vstv %s535
    %v537 = vmul.f32 %v286, %v536
    %v538 = vadd.f32 %v534, %v537
    %s539 = sld [smem:[#allocation9 + $0x101]]
    %v540 = vstv %s539
    %v541 = vmul.f32 %v321, %v540
    %v542 = vadd.f32 %v538, %v541
    %s543 = sld [smem:[#allocation9 + $0x181]]
    %v544 = vstv %s543
    %v545 = vmul.f32 %v356, %v544
    %v546 = vadd.f32 %v542, %v545
    %s547 = sld [smem:[#allocation9 + $0x201]]
    %v548 = vstv %s547
    %v549 = vmul.f32 %v391, %v548
    %v550 = vadd.f32 %v546, %v549
    %s551 = sld [smem:[#allocation9 + $0x281]]
    %v552 = vstv %s551
    %v553 = vmul.f32 %v426, %v552
    %v554 = vadd.f32 %v550, %v553
    %s555 = sld [smem:[#allocation9 + $0x301]]
    %v556 = vstv %s555
    %v557 = vmul.f32 %v461, %v556
    %v558 = vadd.f32 %v554, %v557
    %s559 = sld [smem:[#allocation9 + $0x381]]
    %v560 = vstv %s559
    %v561 = vmul.f32 %v496, %v560
    %v562 = vadd.f32 %v558, %v561
    %s563 = sld [smem:[#allocation10 + $0x1]]
    %v564 = vstv %s563
    %v565 = vadd.f32 %v562, %v564
    %v566 = vmax.f32 %v565, 0.0
    %s567 = sld [smem:[#allocation9 + $0x2]]
    %v568 = vstv %s567
    %v569 = vmul.f32 %v251, %v568
    %s570 = sld [smem:[#allocation9 + $0x82]]
    %v571 = vstv %s570
    %v572 = vmul.f32 %v286, %v571
    %v573 = vadd.f32 %v569, %v572
    %s574 = sld [smem:[#allocation9 + $0x102]]
    %v575 = vstv %s574
    %v576 = vmul.f32 %v321, %v575
    %v577 = vadd.f32 %v573, %v576
    %s578 = sld [smem:[#allocation9 + $0x182]]
    %v579 = vstv %s578
    %v580 = vmul.f32 %v356, %v579
    %v581 = vadd.f32 %v577, %v580
    %s582 = sld [smem:[#allocation9 + $0x202]]
    %v583 = vstv %s582
    %v584 = vmul.f32 %v391, %v583
    %v585 = vadd.f32 %v581, %v584
    %s586 = sld [smem:[#allocation9 + $0x282]]
    %v587 = vstv %s586
    %v588 = vmul.f32 %v426, %v587
    %v589 = vadd.f32 %v585, %v588
    %s590 = sld [smem:[#allocation9 + $0x302]]
    %v591 = vstv %s590
    %v592 = vmul.f32 %v461, %v591
    %v593 = vadd.f32 %v589, %v592
    %s594 = sld [smem:[#allocation9 + $0x382]]
    %v595 = vstv %s594
    %v596 = vmul.f32 %v496, %v595
    %v597 = vadd.f32 %v593, %v596
    %s598 = sld [smem:[#allocation10 + $0x2]]
    %v599 = vstv %s598
    %v600 = vadd.f32 %v597, %v599
    %v601 = vmax.f32 %v600, 0.0
    %s602 = sld [smem:[#allocation9 + $0x3]]
    %v603 = vstv %s602
    %v604 = vmul.f32 %v251, %v603
    %s605 = sld [smem:[#allocation9 + $0x83]]
    %v606 = vstv %s605
    %v607 = vmul.f32 %v286, %v606
    %v608 = vadd.f32 %v604, %v607
    %s609 = sld [smem:[#allocation9 + $0x103]]
    %v610 = vstv %s609
    %v611 = vmul.f32 %v321, %v610
    %v612 = vadd.f32 %v608, %v611
    %s613 = sld [smem:[#allocation9 + $0x183]]
    %v614 = vstv %s613
    %v615 = vmul.f32 %v356, %v614
    %v616 = vadd.f32 %v612, %v615
    %s617 = sld [smem:[#allocation9 + $0x203]]
    %v618 = vstv %s617
    %v619 = vmul.f32 %v391, %v618
    %v620 = vadd.f32 %v616, %v619
    %s621 = sld [smem:[#allocation9 + $0x283]]
    %v622 = vstv %s621
    %v623 = vmul.f32 %v426, %v622
    %v624 = vadd.f32 %v620, %v623
    %s625 = sld [smem:[#allocation9 + $0x303]]
    %v626 = vstv %s625
    %v627 = vmul.f32 %v461, %v626
    %v628 = vadd.f32 %v624, %v627
    %s629 = sld [smem:[#allocation9 + $0x383]]
    %v630 = vstv %s629
    %v631 = vmul.f32 %v496, %v630
    %v632 = vadd.f32 %v628, %v631
    %s633 = sld [smem:[#allocation10 + $0x3]]
    %v634 = vstv %s633
    %v635 = vadd.f32 %v632, %v634
    %v636 = vmax.f32 %v635, 0.0
    %s637 = sld [smem:[#allocation9 + $0x4]]
    %v638 = vstv %s637
    %v639 = vmul.f32 %v251, %v638
    %s640 = sld [smem:[#allocation9 + $0x84]]
    %v641 = vstv %s640
    %v642 = vmul.f32 %v286, %v641
    %v643 = vadd.f32 %v639, %v642
    %s644 = sld [smem:[#allocation9 + $0x104]]
    %v645 = vstv %s644
    %v646 = vmul.f32 %v321, %v645
    %v647 = vadd.f32 %v643, %v646
    %s648 = sld [smem:[#allocation9 + $0x184]]
    %v649 = vstv %s648
    %v650 = vmul.f32 %v356, %v649
    %v651 = vadd.f32 %v647, %v650
    %s652 = sld [smem:[#allocation9 + $0x204]]
    %v653 = vstv %s652
    %v654 = vmul.f32 %v391, %v653
    %v655 = vadd.f32 %v651, %v654
    %s656 = sld [smem:[#allocation9 + $0x284]]
    %v657 = vstv %s656
    %v658 = vmul.f32 %v426, %v657
    %v659 = vadd.f32 %v655, %v658
    %s660 = sld [smem:[#allocation9 + $0x304]]
    %v661 = vstv %s660
    %v662 = vmul.f32 %v461, %v661
    %v663 = vadd.f32 %v659, %v662
    %s664 = sld [smem:[#allocation9 + $0x384]]
    %v665 = vstv %s664
    %v666 = vmul.f32 %v496, %v665
    %v667 = vadd.f32 %v663, %v666
    %s668 = sld [smem:[#allocation10 + $0x4]]
    %v669 = vstv %s668
    %v670 = vadd.f32 %v667, %v669
    %v671 = vmax.f32 %v670, 0.0
    %s672 = sld [smem:[#allocation9 + $0x5]]
    %v673 = vstv %s672
    %v674 = vmul.f32 %v251, %v673
    %s675 = sld [smem:[#allocation9 + $0x85]]
    %v676 = vstv %s675
    %v677 = vmul.f32 %v286, %v676
    %v678 = vadd.f32 %v674, %v677
    %s679 = sld [smem:[#allocation9 + $0x105]]
    %v680 = vstv %s679
    %v681 = vmul.f32 %v321, %v680
    %v682 = vadd.f32 %v678, %v681
    %s683 = sld [smem:[#allocation9 + $0x185]]
    %v684 = vstv %s683
    %v685 = vmul.f32 %v356, %v684
    %v686 = vadd.f32 %v682, %v685
    %s687 = sld [smem:[#allocation9 + $0x205]]
    %v688 = vstv %s687
    %v689 = vmul.f32 %v391, %v688
    %v690 = vadd.f32 %v686, %v689
    %s691 = sld [smem:[#allocation9 + $0x285]]
    %v692 = vstv %s691
    %v693 = vmul.f32 %v426, %v692
    %v694 = vadd.f32 %v690, %v693
    %s695 = sld [smem:[#allocation9 + $0x305]]
    %v696 = vstv %s695
    %v697 = vmul.f32 %v461, %v696
    %v698 = vadd.f32 %v694, %v697
    %s699 = sld [smem:[#allocation9 + $0x385]]
    %v700 = vstv %s699
    %v701 = vmul.f32 %v496, %v700
    %v702 = vadd.f32 %v698, %v701
    %s703 = sld [smem:[#allocation10 + $0x5]]
    %v704 = vstv %s703
    %v705 = vadd.f32 %v702, %v704
    %v706 = vmax.f32 %v705, 0.0
    %s707 = sld [smem:[#allocation9 + $0x6]]
    %v708 = vstv %s707
    %v709 = vmul.f32 %v251, %v708
    %s710 = sld [smem:[#allocation9 + $0x86]]
    %v711 = vstv %s710
    %v712 = vmul.f32 %v286, %v711
    %v713 = vadd.f32 %v709, %v712
    %s714 = sld [smem:[#allocation9 + $0x106]]
    %v715 = vstv %s714
    %v716 = vmul.f32 %v321, %v715
    %v717 = vadd.f32 %v713, %v716
    %s718 = sld [smem:[#allocation9 + $0x186]]
    %v719 = vstv %s718
    %v720 = vmul.f32 %v356, %v719
    %v721 = vadd.f32 %v717, %v720
    %s722 = sld [smem:[#allocation9 + $0x206]]
    %v723 = vstv %s722
    %v724 = vmul.f32 %v391, %v723
    %v725 = vadd.f32 %v721, %v724
    %s726 = sld [smem:[#allocation9 + $0x286]]
    %v727 = vstv %s726
    %v728 = vmul.f32 %v426, %v727
    %v729 = vadd.f32 %v725, %v728
    %s730 = sld [smem:[#allocation9 + $0x306]]
    %v731 = vstv %s730
    %v732 = vmul.f32 %v461, %v731
    %v733 = vadd.f32 %v729, %v732
    %s734 = sld [smem:[#allocation9 + $0x386]]
    %v735 = vstv %s734
    %v736 = vmul.f32 %v496, %v735
    %v737 = vadd.f32 %v733, %v736
    %s738 = sld [smem:[#allocation10 + $0x6]]
    %v739 = vstv %s738
    %v740 = vadd.f32 %v737, %v739
    %v741 = vmax.f32 %v740, 0.0
    %s742 = sld [smem:[#allocation9 + $0x7]]
    %v743 = vstv %s742
    %v744 = vmul.f32 %v251, %v743
    %s745 = sld [smem:[#allocation9 + $0x87]]
    %v746 = vstv %s745
    %v747 = vmul.f32 %v286, %v746
    %v748 = vadd.f32 %v744, %v747
    %s749 = sld [smem:[#allocation9 + $0x107]]
    %v750 = vstv %s749
    %v751 = vmul.f32 %v321, %v750
    %v752 = vadd.f32 %v748, %v751
    %s753 = sld [smem:[#allocation9 + $0x187]]
    %v754 = vstv %s753
    %v755 = vmul.f32 %v356, %v754
    %v756 = vadd.f32 %v752, %v755
    %s757 = sld [smem:[#allocation9 + $0x207]]
    %v758 = vstv %s757
    %v759 = vmul.f32 %v391, %v758
    %v760 = vadd.f32 %v756, %v759
    %s761 = sld [smem:[#allocation9 + $0x287]]
    %v762 = vstv %s761
    %v763 = vmul.f32 %v426, %v762
    %v764 = vadd.f32 %v760, %v763
    %s765 = sld [smem:[#allocation9 + $0x307]]
    %v766 = vstv %s765
    %v767 = vmul.f32 %v461, %v766
    %v768 = vadd.f32 %v764, %v767
    %s769 = sld [smem:[#allocation9 + $0x387]]
    %v770 = vstv %s769
    %v771 = vmul.f32 %v496, %v770
    %v772 = vadd.f32 %v768, %v771
    %s773 = sld [smem:[#allocation10 + $0x7]]
    %v774 = vstv %s773
    %v775 = vadd.f32 %v772, %v774
    %v776 = vmax.f32 %v775, 0.0
    %s777 = sld [smem:[#allocation12]]
    %v778 = vstv %s777
    %v779 = vmul.f32 %v531, %v778
    %s780 = sld [smem:[#allocation12 + $0x80]]
    %v781 = vstv %s780
    %v782 = vmul.f32 %v566, %v781
    %v783 = vadd.f32 %v779, %v782
    %s784 = sld [smem:[#allocation12 + $0x100]]
    %v785 = vstv %s784
    %v786 = vmul.f32 %v601, %v785
    %v787 = vadd.f32 %v783, %v786
    %s788 = sld [smem:[#allocation12 + $0x180]]
    %v789 = vstv %s788
    %v790 = vmul.f32 %v636, %v789
    %v791 = vadd.f32 %v787, %v790
    %s792 = sld [smem:[#allocation12 + $0x200]]
    %v793 = vstv %s792
    %v794 = vmul.f32 %v671, %v793
    %v795 = vadd.f32 %v791, %v794
    %s796 = sld [smem:[#allocation12 + $0x280]]
    %v797 = vstv %s796
    %v798 = vmul.f32 %v706, %v797
    %v799 = vadd.f32 %v795, %v798
    %s800 = sld [smem:[#allocation12 + $0x300]]
    %v801 = vstv %s800
    %v802 = vmul.f32 %v741, %v801
    %v803 = vadd.f32 %v799, %v802
    %s804 = sld [smem:[#allocation12 + $0x380]]
    %v805 = vstv %s804
    %v806 = vmul.f32 %v776, %v805
    %v807 = vadd.f32 %v803, %v806
    %s808 = sld [smem:[#allocation13]]
    %v809 = vstv %s808
    %v810 = vadd.f32 %v807, %v809
    %s811 = sld [smem:[#allocation12 + $0x1]]
    %v812 = vstv %s811
    %v813 = vmul.f32 %v531, %v812
    %s814 = sld [smem:[#allocation12 + $0x81]]
    %v815 = vstv %s814
    %v816 = vmul.f32 %v566, %v815
    %v817 = vadd.f32 %v813, %v816
    %s818 = sld [smem:[#allocation12 + $0x101]]
    %v819 = vstv %s818
    %v820 = vmul.f32 %v601, %v819
    %v821 = vadd.f32 %v817, %v820
    %s822 = sld [smem:[#allocation12 + $0x181]]
    %v823 = vstv %s822
    %v824 = vmul.f32 %v636, %v823
    %v825 = vadd.f32 %v821, %v824
    %s826 = sld [smem:[#allocation12 + $0x201]]
    %v827 = vstv %s826
    %v828 = vmul.f32 %v671, %v827
    %v829 = vadd.f32 %v825, %v828
    %s830 = sld [smem:[#allocation12 + $0x281]]
    %v831 = vstv %s830
    %v832 = vmul.f32 %v706, %v831
    %v833 = vadd.f32 %v829, %v832
    %s834 = sld [smem:[#allocation12 + $0x301]]
    %v835 = vstv %s834
    %v836 = vmul.f32 %v741, %v835
    %v837 = vadd.f32 %v833, %v836
    %s838 = sld [smem:[#allocation12 + $0x381]]
    %v839 = vstv %s838
    %v840 = vmul.f32 %v776, %v839
    %v841 = vadd.f32 %v837, %v840
    %s842 = sld [smem:[#allocation13 + $0x1]]
    %v843 = vstv %s842
    %v844 = vadd.f32 %v841, %v843
    %s845 = sld [smem:[#allocation12 + $0x2]]
    %v846 = vstv %s845
    %v847 = vmul.f32 %v531, %v846
    %s848 = sld [smem:[#allocation12 + $0x82]]
    %v849 = vstv %s848
    %v850 = vmul.f32 %v566, %v849
    %v851 = vadd.f32 %v847, %v850
    %s852 = sld [smem:[#allocation12 + $0x102]]
    %v853 = vstv %s852
    %v854 = vmul.f32 %v601, %v853
    %v855 = vadd.f32 %v851, %v854
    %s856 = sld [smem:[#allocation12 + $0x182]]
    %v857 = vstv %s856
    %v858 = vmul.f32 %v636, %v857
    %v859 = vadd.f32 %v855, %v858
    %s860 = sld [smem:[#allocation12 + $0x202]]
    %v861 = vstv %s860
    %v862 = vmul.f32 %v671, %v861
    %v863 = vadd.f32 %v859, %v862
    %s864 = sld [smem:[#allocation12 + $0x282]]
    %v865 = vstv %s864
    %v866 = vmul.f32 %v706, %v865
    %v867 = vadd.f32 %v863, %v866
    %s868 = sld [smem:[#allocation12 + $0x302]]
    %v869 = vstv %s868
    %v870 = vmul.f32 %v741, %v869
    %v871 = vadd.f32 %v867, %v870
    %s872 = sld [smem:[#allocation12 + $0x382]]
    %v873 = vstv %s872
    %v874 = vmul.f32 %v776, %v873
    %v875 = vadd.f32 %v871, %v874
    %s876 = sld [smem:[#allocation13 + $0x2]]
    %v877 = vstv %s876
    %v878 = vadd.f32 %v875, %v877
    %879 = vst [vmem:[%s9] sm:$0xff] %v810
    %s880 = scalar_lea.vmem %s9, 8
    %881 = vst [vmem:[%s880] sm:$0xff] %v844
    %s882 = scalar_lea.vmem %s9, 16
    %883 = vst [vmem:[%s882] sm:$0xff] %v878
    // Predicated region
    $region70: #{mlp_forward.1} parent=1 // pred_check
      _
    $region71: #{mlp_forward.1} parent=1 // pred_check_branch
      %885 = sbr.rel (0) target = $region73
    $region72: #{mlp_forward.1} parent=1 // pred_region
      _
    $region73: #{mlp_forward.1} parent=1 // pred_fallthru
      _
    // Predicated region
    $region74: #{mlp_forward.1} parent=1 // pred_check
      _
    $region75: #{mlp_forward.1} parent=1 // pred_check_branch
      %887 = sbr.rel (0) target = $region77
    $region76: #{mlp_forward.1} parent=1 // pred_region
      _
    $region77: #{mlp_forward.1} parent=1 // pred_fallthru
      _
    %888 = vsyncpa [#allocation3], 1
    %889 = vsyncpa [#allocation5], 1
    %890 = vsyncpa [#allocation8], 1
    %891 = vsyncpa [#allocation11], 1
    %892 = vsyncpa [#allocation14], 1

</llo_original>
